<compile_context>
chip_gen: v6e
topology: v6e:2x2x1
jax: 0.10.0
libtpu: 0.0.40
codegen_flags: <defaults>
</compile_context>

<pallas_src>
import jax
import jax.numpy as jnp
import numpy as np
from jax import lax
from jax.experimental import pallas as pl
from jax.experimental.pallas import tpu as pltpu


def bottleneck_kernel(x_ref, w1_ref, b1_ref, w2_ref, b2_ref, w3_ref, b3_ref,
                      out_ref, pad_ref):
    # pad_ref: VMEM scratch (H+2, W+2, P) f32 holding the zero-padded conv2
    # input.  Only the 1-element halo border is zeroed each step (cheap); the
    # interior is fully overwritten every step.
    Hp, Wp, P = pad_ref.shape
    H, W = Hp - 2, Wp - 2
    Cin = x_ref.shape[-1]
    Cout = out_ref.shape[-1]

    x_f32 = x_ref[0].astype(jnp.float32)              # (H, W, Cin)
    x2 = x_f32.reshape(H * W, Cin)                    # residual (f32)

    # ---- conv1 (1x1) + folded bn1 + relu  (bf16 MXU, f32 accumulate) --------
    h1 = jnp.dot(x2.astype(jnp.bfloat16), w1_ref[...],
                 preferred_element_type=jnp.float32)
    h1 = jnp.maximum(h1 + b1_ref[...], 0.0)           # (H*W, P) f32

    # ---- conv2 (3x3, stride 1, pad 1) + folded bn2 + relu -------------------
    # Zero only the halo border (not the whole buffer), then store the interior.
    pad_ref[0:1, :, :] = jnp.zeros((1, Wp, P), jnp.float32)
    pad_ref[H + 1:H + 2, :, :] = jnp.zeros((1, Wp, P), jnp.float32)
    pad_ref[1:H + 1, 0:1, :] = jnp.zeros((H, 1, P), jnp.float32)
    pad_ref[1:H + 1, W + 1:W + 2, :] = jnp.zeros((H, 1, P), jnp.float32)
    pad_ref[1:H + 1, 1:W + 1, :] = h1.reshape(H, W, P)
    padded = pad_ref[...]                             # (H+2, W+2, P)

    # im2col: one (H*W, 9P) slab -> a single K=9P matmul on the MXU.
    taps = [lax.slice(padded, (dy, dx, 0), (dy + H, dx + W, P))
            for dy in range(3) for dx in range(3)]
    slab = jnp.concatenate(taps, axis=-1).reshape(H * W, 9 * P)
    h2 = jnp.dot(slab.astype(jnp.bfloat16), w2_ref[...],
                 preferred_element_type=jnp.float32)
    h2 = jnp.maximum(h2 + b2_ref[...], 0.0)           # (H*W, P) f32

    # ---- conv3 (1x1, expansion 4) + folded bn3 + residual + relu ------------
    h3 = jnp.dot(h2.astype(jnp.bfloat16), w3_ref[...],
                 preferred_element_type=jnp.float32)
    out = jnp.maximum(h3 + b3_ref[...] + x2, 0.0)     # (H*W, Cout)
    out_ref[0] = out.reshape(H, W, Cout).astype(out_ref.dtype)


def bottleneck_pallas(x, params):
    """x: (N, H, W, Cin) float32, NHWC.  Returns (N, H, W, Cin)."""
    N, H, W, Cin = x.shape
    w1, b1, w2, b2, w3, b3 = params
    P = w1.shape[1]
    Cout = w3.shape[1]
    assert Cout == Cin, "identity residual requires inplanes == planes * 4"
    assert w2.shape == (9 * P, P)

    full = lambda shape: pl.BlockSpec(shape, lambda b: (0,) * len(shape))

    return pl.pallas_call(
        bottleneck_kernel,
        out_shape=jax.ShapeDtypeStruct((N, H, W, Cout), x.dtype),
        grid_spec=pltpu.PrefetchScalarGridSpec(
            num_scalar_prefetch=0,
            grid=(N,),
            in_specs=[
                pl.BlockSpec((1, H, W, Cin), lambda b: (b, 0, 0, 0)),
                full((Cin, P)),            # w1   (bf16, bn1 scale folded)
                full((1, P)),              # bn1 bias (f32)
                full((9 * P, P)),          # w2   (bf16, bn2 scale folded, im2col layout)
                full((1, P)),              # bn2 bias (f32)
                full((P, Cout)),           # w3   (bf16, bn3 scale folded)
                full((1, Cout)),           # bn3 bias (f32)
            ],
            out_specs=pl.BlockSpec((1, H, W, Cout), lambda b: (b, 0, 0, 0)),
            scratch_shapes=[pltpu.VMEM((H + 2, W + 2, P), jnp.float32)],
        ),
        # Batch axis is data-independent (no cross-iteration scratch state),
        # so mark it parallel for megacore sharding on v7x.
        compiler_params=pltpu.CompilerParams(
            dimension_semantics=("parallel",)),
        # NOTE: for real ResNet late-stage shapes, add a spatial row-tiling
        # grid axis and set vmem_limit_bytes explicitly (v7x has 64 MiB VMEM).
    )(x, w1, b1, w2, b2, w3, b3)


def reference_bottleneck(x, params):
    """Pure-JAX f32 reference using the same folded weights (NHWC)."""
    w1, b1, w2, b2, w3, b3 = params
    Cin = x.shape[-1]
    P = w1.shape[1]
    Cout = w3.shape[1]
    dn = ("NHWC", "HWIO", "NHWC")

    w1f = w1.astype(jnp.float32).reshape(1, 1, Cin, P)
    w2f = w2.astype(jnp.float32).reshape(3, 3, P, P)
    w3f = w3.astype(jnp.float32).reshape(1, 1, P, Cout)

    h = lax.conv_general_dilated(x, w1f, (1, 1), "VALID", dimension_numbers=dn)
    h = jnp.maximum(h + b1.reshape(1, 1, 1, P), 0.0)
    h = lax.conv_general_dilated(h, w2f, (1, 1), ((1, 1), (1, 1)),
                                 dimension_numbers=dn)
    h = jnp.maximum(h + b2.reshape(1, 1, 1, P), 0.0)
    h = lax.conv_general_dilated(h, w3f, (1, 1), "VALID", dimension_numbers=dn)
    h = h + b3.reshape(1, 1, 1, Cout)
    return jnp.maximum(h + x, 0.0)


def make_params(key, inplanes, planes, eps=1e-5):
    """Deterministic conv weights + inference-mode BN folded into them."""
    expansion = 4
    Cout = planes * expansion
    ks = jax.random.split(key, 6)

    w1 = jax.random.normal(ks[0], (inplanes, planes), jnp.float32) * 0.1
    w2 = jax.random.normal(ks[1], (3, 3, planes, planes), jnp.float32) * 0.1
    w3 = jax.random.normal(ks[2], (planes, Cout), jnp.float32) * 0.1

    def bn(k, c):
        kg, kb, km, kv = jax.random.split(k, 4)
        gamma = 1.0 + 0.1 * jax.random.normal(kg, (c,), jnp.float32)
        beta = 0.1 * jax.random.normal(kb, (c,), jnp.float32)
        mean = 0.1 * jax.random.normal(km, (c,), jnp.float32)
        var = jnp.abs(jax.random.normal(kv, (c,), jnp.float32)) + 0.5
        scale = gamma / jnp.sqrt(var + eps)
        bias = beta - mean * scale
        return scale, bias

    s1, b1 = bn(ks[3], planes)
    s2, b2 = bn(ks[4], planes)
    s3, b3 = bn(ks[5], Cout)

    # Fold BN scale into the output-channel axis of each conv weight, cast bf16.
    w1f = (w1 * s1[None, :]).astype(jnp.bfloat16)
    w2f = (w2 * s2[None, None, None, :]).reshape(9 * planes, planes)
    w2f = w2f.astype(jnp.bfloat16)                     # (9P, P) im2col layout
    w3f = (w3 * s3[None, :]).astype(jnp.bfloat16)

    return (w1f, b1.reshape(1, planes).astype(jnp.float32),
            w2f, b2.reshape(1, planes).astype(jnp.float32),
            w3f, b3.reshape(1, Cout).astype(jnp.float32))


if __name__ == "__main__":
    # Small shapes consistent with the module: downsample=None, stride=1
    # => inplanes == planes * 4.  W multiple of 8 keeps the (H,W)->H*W
    # reshape layout-free; Cin = Cout = 128 keeps the output store lane-dense.
    N, H, W = 2, 16, 16
    planes = 32
    inplanes = planes * 4  # 128

    key = jax.random.PRNGKey(0)
    kx, kp = jax.random.split(key)
    x = jax.random.normal(kx, (N, H, W, inplanes), jnp.float32)
    params = make_params(kp, inplanes, planes)

    out = jax.block_until_ready(bottleneck_pallas(x, params))
    ref = jax.block_until_ready(reference_bottleneck(x, params))

    # bf16 activations/weights on the MXU vs f32 reference -> loosened tolerance.
    np.testing.assert_allclose(np.asarray(out), np.asarray(ref),
                               rtol=2e-2, atol=3e-2)
    print("KERNEL_OK")
</pallas_src>

<mosaic_0001>
module attributes {stable_mosaic.version = 11 : i64} {
  func.func @bottleneck_kernel(%arg0: i32, %arg1: memref<1x16x16x128xf32, #tpu.memory_space<vmem>>, %arg2: memref<128x32xbf16, #tpu.memory_space<vmem>>, %arg3: memref<1x32xf32, #tpu.memory_space<vmem>>, %arg4: memref<288x32xbf16, #tpu.memory_space<vmem>>, %arg5: memref<1x32xf32, #tpu.memory_space<vmem>>, %arg6: memref<32x128xbf16, #tpu.memory_space<vmem>>, %arg7: memref<1x128xf32, #tpu.memory_space<vmem>>, %arg8: memref<1x16x16x128xf32, #tpu.memory_space<vmem>>, %arg9: memref<18x18x32xf32, #tpu.memory_space<vmem>>) attributes {dimension_semantics = [#tpu.dimension_semantics<parallel>], iteration_bounds = array<i64: 2>, scalar_prefetch = 0 : i64, scratch_operands = 1 : i64, tpu.core_type = #tpu.core_type<tc>, window_params = [{transform_indices = @transform_0, window_bounds = array<i64: 1, 16, 16, 128>}, {pipeline_mode = #tpu.pipeline_mode<synchronous>, transform_indices = @transform_1, window_bounds = array<i64: 128, 32>}, {pipeline_mode = #tpu.pipeline_mode<synchronous>, transform_indices = @transform_2, window_bounds = array<i64: 1, 32>}, {pipeline_mode = #tpu.pipeline_mode<synchronous>, transform_indices = @transform_3, window_bounds = array<i64: 288, 32>}, {pipeline_mode = #tpu.pipeline_mode<synchronous>, transform_indices = @transform_4, window_bounds = array<i64: 1, 32>}, {pipeline_mode = #tpu.pipeline_mode<synchronous>, transform_indices = @transform_5, window_bounds = array<i64: 32, 128>}, {pipeline_mode = #tpu.pipeline_mode<synchronous>, transform_indices = @transform_6, window_bounds = array<i64: 1, 128>}, {transform_indices = @transform_7, window_bounds = array<i64: 1, 16, 16, 128>}]} {
    %c0 = arith.constant 0 : index
    %c0_0 = arith.constant 0 : index
    %c0_1 = arith.constant 0 : index
    %c0_2 = arith.constant 0 : index
    %0 = vector.load %arg1[%c0, %c0_0, %c0_1, %c0_2] : memref<1x16x16x128xf32, #tpu.memory_space<vmem>>, vector<1x16x16x128xf32>
    %1 = vector.shape_cast %0 : vector<1x16x16x128xf32> to vector<16x16x128xf32>
    %2 = vector.shape_cast %1 : vector<16x16x128xf32> to vector<256x128xf32>
    %3 = arith.truncf %2 : vector<256x128xf32> to vector<256x128xbf16>
    %c0_3 = arith.constant 0 : index
    %c0_4 = arith.constant 0 : index
    %4 = vector.load %arg2[%c0_3, %c0_4] : memref<128x32xbf16, #tpu.memory_space<vmem>>, vector<128x32xbf16>
    %cst = arith.constant dense<0.000000e+00> : vector<256x32xf32>
    %5 = tpu.matmul %3, %4, %cst {dimension_numbers = #tpu.dot_dimension_numbers<[1], [0], [0], [1], [0, 0, 1, 1], [], []>} : vector<256x128xbf16>, vector<128x32xbf16>, vector<256x32xf32> -> vector<256x32xf32>
    %c0_5 = arith.constant 0 : index
    %c0_6 = arith.constant 0 : index
    %6 = vector.load %arg3[%c0_5, %c0_6] : memref<1x32xf32, #tpu.memory_space<vmem>>, vector<1x32xf32>
    %7 = vector.broadcast %6 : vector<1x32xf32> to vector<256x32xf32>
    %8 = arith.addf %5, %7 : vector<256x32xf32>
    %cst_7 = arith.constant 0.000000e+00 : f32
    %9 = vector.broadcast %cst_7 : f32 to vector<256x32xf32>
    %10 = arith.maximumf %8, %9 : vector<256x32xf32>
    %cst_8 = arith.constant 0.000000e+00 : f32
    %11 = vector.broadcast %cst_8 : f32 to vector<1x18x32xf32>
    %c0_9 = arith.constant 0 : index
    %c0_10 = arith.constant 0 : index
    %c0_11 = arith.constant 0 : index
    %12 = vector.load %arg9[%c0_9, %c0_10, %c0_11] : memref<18x18x32xf32, #tpu.memory_space<vmem>>, vector<1x18x32xf32>
    tpu.vector_store %arg9[%c0_9, %c0_10, %c0_11], %11 {strides = array<i32>} : memref<18x18x32xf32, #tpu.memory_space<vmem>>, vector<1x18x32xf32>,
    %cst_12 = arith.constant 0.000000e+00 : f32
    %13 = vector.broadcast %cst_12 : f32 to vector<1x18x32xf32>
    %c17 = arith.constant 17 : index
    %c0_13 = arith.constant 0 : index
    %c0_14 = arith.constant 0 : index
    %14 = vector.load %arg9[%c17, %c0_13, %c0_14] : memref<18x18x32xf32, #tpu.memory_space<vmem>>, vector<1x18x32xf32>
    tpu.vector_store %arg9[%c17, %c0_13, %c0_14], %13 {strides = array<i32>} : memref<18x18x32xf32, #tpu.memory_space<vmem>>, vector<1x18x32xf32>,
    %cst_15 = arith.constant 0.000000e+00 : f32
    %15 = vector.broadcast %cst_15 : f32 to vector<16x1x32xf32>
    %c1 = arith.constant 1 : index
    %c0_16 = arith.constant 0 : index
    %c0_17 = arith.constant 0 : index
    %16 = vector.load %arg9[%c1, %c0_16, %c0_17] : memref<18x18x32xf32, #tpu.memory_space<vmem>>, vector<16x1x32xf32>
    tpu.vector_store %arg9[%c1, %c0_16, %c0_17], %15 {strides = array<i32>} : memref<18x18x32xf32, #tpu.memory_space<vmem>>, vector<16x1x32xf32>,
    %cst_18 = arith.constant 0.000000e+00 : f32
    %17 = vector.broadcast %cst_18 : f32 to vector<16x1x32xf32>
    %c1_19 = arith.constant 1 : index
    %c17_20 = arith.constant 17 : index
    %c0_21 = arith.constant 0 : index
    %18 = vector.load %arg9[%c1_19, %c17_20, %c0_21] : memref<18x18x32xf32, #tpu.memory_space<vmem>>, vector<16x1x32xf32>
    tpu.vector_store %arg9[%c1_19, %c17_20, %c0_21], %17 {strides = array<i32>} : memref<18x18x32xf32, #tpu.memory_space<vmem>>, vector<16x1x32xf32>,
    %19 = vector.shape_cast %10 : vector<256x32xf32> to vector<16x16x32xf32>
    %c1_22 = arith.constant 1 : index
    %c1_23 = arith.constant 1 : index
    %c0_24 = arith.constant 0 : index
    %20 = vector.load %arg9[%c1_22, %c1_23, %c0_24] : memref<18x18x32xf32, #tpu.memory_space<vmem>>, vector<16x16x32xf32>
    tpu.vector_store %arg9[%c1_22, %c1_23, %c0_24], %19 {strides = array<i32>} : memref<18x18x32xf32, #tpu.memory_space<vmem>>, vector<16x16x32xf32>,
    %c0_25 = arith.constant 0 : index
    %c0_26 = arith.constant 0 : index
    %c0_27 = arith.constant 0 : index
    %21 = vector.load %arg9[%c0_25, %c0_26, %c0_27] : memref<18x18x32xf32, #tpu.memory_space<vmem>>, vector<18x18x32xf32>
    %22 = vector.extract_strided_slice %21 {offsets = [0, 0, 0], sizes = [16, 16, 32], strides = [1, 1, 1]} : vector<18x18x32xf32> to vector<16x16x32xf32>
    %23 = vector.extract_strided_slice %21 {offsets = [0, 1, 0], sizes = [16, 16, 32], strides = [1, 1, 1]} : vector<18x18x32xf32> to vector<16x16x32xf32>
    %24 = vector.extract_strided_slice %21 {offsets = [0, 2, 0], sizes = [16, 16, 32], strides = [1, 1, 1]} : vector<18x18x32xf32> to vector<16x16x32xf32>
    %25 = vector.extract_strided_slice %21 {offsets = [1, 0, 0], sizes = [16, 16, 32], strides = [1, 1, 1]} : vector<18x18x32xf32> to vector<16x16x32xf32>
    %26 = vector.extract_strided_slice %21 {offsets = [1, 1, 0], sizes = [16, 16, 32], strides = [1, 1, 1]} : vector<18x18x32xf32> to vector<16x16x32xf32>
    %27 = vector.extract_strided_slice %21 {offsets = [1, 2, 0], sizes = [16, 16, 32], strides = [1, 1, 1]} : vector<18x18x32xf32> to vector<16x16x32xf32>
    %28 = vector.extract_strided_slice %21 {offsets = [2, 0, 0], sizes = [16, 16, 32], strides = [1, 1, 1]} : vector<18x18x32xf32> to vector<16x16x32xf32>
    %29 = vector.extract_strided_slice %21 {offsets = [2, 1, 0], sizes = [16, 16, 32], strides = [1, 1, 1]} : vector<18x18x32xf32> to vector<16x16x32xf32>
    %30 = vector.extract_strided_slice %21 {offsets = [2, 2, 0], sizes = [16, 16, 32], strides = [1, 1, 1]} : vector<18x18x32xf32> to vector<16x16x32xf32>
    %31 = tpu.concatenate %22, %23, %24, %25, %26, %27, %28, %29, %30 in 2 : vector<16x16x32xf32>, vector<16x16x32xf32>, vector<16x16x32xf32>, vector<16x16x32xf32>, vector<16x16x32xf32>, vector<16x16x32xf32>, vector<16x16x32xf32>, vector<16x16x32xf32>, vector<16x16x32xf32> -> vector<16x16x288xf32>
    %32 = vector.shape_cast %31 : vector<16x16x288xf32> to vector<256x288xf32>
    %33 = arith.truncf %32 : vector<256x288xf32> to vector<256x288xbf16>
    %c0_28 = arith.constant 0 : index
    %c0_29 = arith.constant 0 : index
    %34 = vector.load %arg4[%c0_28, %c0_29] : memref<288x32xbf16, #tpu.memory_space<vmem>>, vector<288x32xbf16>
    %cst_30 = arith.constant dense<0.000000e+00> : vector<256x32xf32>
    %35 = tpu.matmul %33, %34, %cst_30 {dimension_numbers = #tpu.dot_dimension_numbers<[1], [0], [0], [1], [0, 0, 1, 1], [], []>} : vector<256x288xbf16>, vector<288x32xbf16>, vector<256x32xf32> -> vector<256x32xf32>
    %c0_31 = arith.constant 0 : index
    %c0_32 = arith.constant 0 : index
    %36 = vector.load %arg5[%c0_31, %c0_32] : memref<1x32xf32, #tpu.memory_space<vmem>>, vector<1x32xf32>
    %37 = vector.broadcast %36 : vector<1x32xf32> to vector<256x32xf32>
    %38 = arith.addf %35, %37 : vector<256x32xf32>
    %cst_33 = arith.constant 0.000000e+00 : f32
    %39 = vector.broadcast %cst_33 : f32 to vector<256x32xf32>
    %40 = arith.maximumf %38, %39 : vector<256x32xf32>
    %41 = arith.truncf %40 : vector<256x32xf32> to vector<256x32xbf16>
    %c0_34 = arith.constant 0 : index
    %c0_35 = arith.constant 0 : index
    %42 = vector.load %arg6[%c0_34, %c0_35] : memref<32x128xbf16, #tpu.memory_space<vmem>>, vector<32x128xbf16>
    %cst_36 = arith.constant dense<0.000000e+00> : vector<256x128xf32>
    %43 = tpu.matmul %41, %42, %cst_36 {dimension_numbers = #tpu.dot_dimension_numbers<[1], [0], [0], [1], [0, 0, 1, 1], [], []>} : vector<256x32xbf16>, vector<32x128xbf16>, vector<256x128xf32> -> vector<256x128xf32>
    %c0_37 = arith.constant 0 : index
    %c0_38 = arith.constant 0 : index
    %44 = vector.load %arg7[%c0_37, %c0_38] : memref<1x128xf32, #tpu.memory_space<vmem>>, vector<1x128xf32>
    %45 = vector.broadcast %44 : vector<1x128xf32> to vector<256x128xf32>
    %46 = arith.addf %43, %45 : vector<256x128xf32>
    %47 = arith.addf %46, %2 : vector<256x128xf32>
    %cst_39 = arith.constant 0.000000e+00 : f32
    %48 = vector.broadcast %cst_39 : f32 to vector<256x128xf32>
    %49 = arith.maximumf %47, %48 : vector<256x128xf32>
    %50 = vector.shape_cast %49 : vector<256x128xf32> to vector<16x16x128xf32>
    %c0_40 = arith.constant 0 : index
    %c0_41 = arith.constant 0 : index
    %c0_42 = arith.constant 0 : index
    %c0_43 = arith.constant 0 : index
    %51 = vector.load %arg8[%c0_40, %c0_41, %c0_42, %c0_43] : memref<1x16x16x128xf32, #tpu.memory_space<vmem>>, vector<1x16x16x128xf32>
    %52 = vector.shape_cast %51 : vector<1x16x16x128xf32> to vector<16x16x128xf32>
    %53 = vector.shape_cast %50 : vector<16x16x128xf32> to vector<1x16x16x128xf32>
    tpu.vector_store %arg8[%c0_40, %c0_41, %c0_42, %c0_43], %53 {strides = array<i32>} : memref<1x16x16x128xf32, #tpu.memory_space<vmem>>, vector<1x16x16x128xf32>,
    return
  }
  func.func @transform_0(%arg0: i32) -> (i32, i32, i32, i32) {
    %c0_i32 = arith.constant 0 : i32
    %c0_i32_0 = arith.constant 0 : i32
    %c0_i32_1 = arith.constant 0 : i32
    %c0_i32_2 = arith.constant 0 : i32
    return %arg0, %c0_i32, %c0_i32_0, %c0_i32_1 : i32, i32, i32, i32
  }
  func.func @transform_1(%arg0: i32) -> (i32, i32) {
    %c0_i32 = arith.constant 0 : i32
    %c0_i32_0 = arith.constant 0 : i32
    %c0_i32_1 = arith.constant 0 : i32
    return %c0_i32, %c0_i32_0 : i32, i32
  }
  func.func @transform_2(%arg0: i32) -> (i32, i32) {
    %c0_i32 = arith.constant 0 : i32
    %c0_i32_0 = arith.constant 0 : i32
    %c0_i32_1 = arith.constant 0 : i32
    return %c0_i32, %c0_i32_0 : i32, i32
  }
  func.func @transform_3(%arg0: i32) -> (i32, i32) {
    %c0_i32 = arith.constant 0 : i32
    %c0_i32_0 = arith.constant 0 : i32
    %c0_i32_1 = arith.constant 0 : i32
    return %c0_i32, %c0_i32_0 : i32, i32
  }
  func.func @transform_4(%arg0: i32) -> (i32, i32) {
    %c0_i32 = arith.constant 0 : i32
    %c0_i32_0 = arith.constant 0 : i32
    %c0_i32_1 = arith.constant 0 : i32
    return %c0_i32, %c0_i32_0 : i32, i32
  }
  func.func @transform_5(%arg0: i32) -> (i32, i32) {
    %c0_i32 = arith.constant 0 : i32
    %c0_i32_0 = arith.constant 0 : i32
    %c0_i32_1 = arith.constant 0 : i32
    return %c0_i32, %c0_i32_0 : i32, i32
  }
  func.func @transform_6(%arg0: i32) -> (i32, i32) {
    %c0_i32 = arith.constant 0 : i32
    %c0_i32_0 = arith.constant 0 : i32
    %c0_i32_1 = arith.constant 0 : i32
    return %c0_i32, %c0_i32_0 : i32, i32
  }
  func.func @transform_7(%arg0: i32) -> (i32, i32, i32, i32) {
    %c0_i32 = arith.constant 0 : i32
    %c0_i32_0 = arith.constant 0 : i32
    %c0_i32_1 = arith.constant 0 : i32
    %c0_i32_2 = arith.constant 0 : i32
    return %arg0, %c0_i32, %c0_i32_0, %c0_i32_1 : i32, i32, i32, i32
  }
}

</mosaic_0001>

<llo_original>
// kernel: tpu_custom_call.1
$region0: #{tpu_custom_call.1}
  #allocation0 [shape = 'u32[]', space=smem, size = 0x4, offset = 0x4, fixed_abs, tag = 'smem constant byte address 0x4 - core index']
  #allocation1 [shape = 'u32[144,128]{1,0:T(1,128)}', space=vmem, size = 0x12000, scoped, tag = 'internal scratch']
  #allocation2 [shape = 'f32[18,18,32]{2,1,0:T(8,128)}', space=vmem, size = 0x36000, scoped, tag = 'scratch operand']
  %s0 = inlined_call_operand.hbm [shape: f32[2,16,16,128], index: 0, kind: input, shape index: {}]
  %s1 = inlined_call_operand.vmem [shape: bf16[128,32], index: 1, kind: input, shape index: {}]
  %s2 = inlined_call_operand.vmem [shape: f32[1,32], index: 2, kind: input, shape index: {}]
  %s3 = inlined_call_operand.vmem [shape: bf16[288,32], index: 3, kind: input, shape index: {}]
  %s4 = inlined_call_operand.vmem [shape: f32[1,32], index: 4, kind: input, shape index: {}]
  %s5 = inlined_call_operand.vmem [shape: bf16[32,128], index: 5, kind: input, shape index: {}]
  %s6 = inlined_call_operand.vmem [shape: f32[1,128], index: 6, kind: input, shape index: {}]
  %s7 = inlined_call_operand.hbm [shape: f32[2,16,16,128], index: 7, kind: output, shape index: {}]
  %s8 = sld [smem:[#allocation0]]
  $region65: #{tpu_custom_call.1} parent=0
    _
  %s10 = ssub.s32 1, %s8
  %s11 = scalar_select 0, %s10, %s8
  $region1: #{tpu_custom_call.1} parent=0
    #allocation3 [shape = 'u8[262144]{0}', space=vmem, size = 0x40000, scoped, tag = 'input window, operand 0']
    #allocation4 [shape = 's32[2]{0}', space=sflag, size = 0x8, scoped, tag = 'scoped memory for tpu_custom_call.1']
    #allocation5 [shape = 's32[2]{0}', space=sflag, size = 0x8, scoped, tag = 'scoped memory for tpu_custom_call.1']
    #allocation6 [shape = 'u8[262144]{0}', space=vmem, size = 0x40000, scoped, tag = 'output window, operand 0']
    %12 = vsyncpa [#allocation4], 0
    %s13 = scalar_lea.sflag [#allocation4], 1
    %14 = vsyncpa %s13, 0
    %15 = vsyncpa [#allocation5], 0
    %s16 = scalar_lea.sflag [#allocation5], 1
    %17 = vsyncpa %s16, 0
    loop: start=0, step=1, limit=4
    $region2: #{tpu_custom_call.1} parent=1 // loop_pre_header
      _
    $region3: #{tpu_custom_call.1} parent=1 // loop_header
      %s19 = sphi 0, %s23
      %p20 = scmp.ge.s32.totalorder %s19, 4
      %s29 = sphi 0, %s31
      %s32 = sphi 0, %s29
      %s33 = sphi 0, %s32
      %s49 = sphi 0, %s33
      %s53 = sphi 0, %s53
      %s55 = sphi 0, %s53
      %s56 = sphi 0, %s55
      %s70 = sphi 0, %s56
      %s74 = sphi 0, %s74
      %s76 = sphi 0, %s74
      %s77 = sphi 0, %s76
      %s91 = sphi 0, %s77
      %s95 = sphi 0, %s95
      %s97 = sphi 0, %s95
      %s98 = sphi 0, %s97
      %s112 = sphi 0, %s98
      %s116 = sphi 0, %s116
      %s118 = sphi 0, %s116
      %s119 = sphi 0, %s118
      %s133 = sphi 0, %s119
      %s137 = sphi 0, %s137
      %s139 = sphi 0, %s137
      %s140 = sphi 0, %s139
      %s154 = sphi 0, %s140
      %s158 = sphi 0, %s158
      %s160 = sphi 0, %s158
      %s161 = sphi 0, %s160
      %s175 = sphi 0, %s161
      %s181 = sphi 0, %s183
      %s184 = sphi 0, %s181
      %s185 = sphi 0, %s184
      %s201 = sphi 0, %s185
    $region4: #{tpu_custom_call.1} parent=1 // loop_header_branch
      %22 = sbr.rel (%p20) target = $region8
    $region5: #{tpu_custom_call.1} parent=1 // loop_body
      %s24 = ssub.s32 %s19, 1
      %s25 = ssub.s32 %s19, 2
      %s26 = sadd.s32 %s19, 1
      %s27 = ssub.s32 %s19, %s26
      %p28 = scmp.eq.s32.totalorder %s27, 0
      %s30 = sadd.s32 %s29, 1
      %s31 = scalar_select %p28, %s29, %s30
      %p34 = pneg %p28
      %p35 = scmp.eq.s32.totalorder %s19, 1
      %p36 = por %p34, %p35
      %p37 = scmp.ne.s32.totalorder %s29, %s32
      %p38 = scmp.eq.s32.totalorder %s19, 0
      %p39 = por %p37, %p38
      %p40 = scmp.ne.s32.totalorder %s29, %s32
      %p41 = scmp.eq.s32.totalorder %s24, 1
      %p42 = por %p40, %p41
      %p43 = scmp.ne.s32.totalorder %s32, %s33
      %p44 = scmp.eq.s32.totalorder %s24, 0
      %p45 = por %p43, %p44
      %p46 = scmp.ne.s32.totalorder %s32, %s33
      %p47 = scmp.eq.s32.totalorder %s25, 1
      %p48 = por %p46, %p47
      %p50 = scmp.ne.s32.totalorder %s33, %s49
      %p51 = scmp.eq.s32.totalorder %s25, 0
      %p52 = por %p50, %p51
      %s54 = sadd.s32 %s53, 1
      %p57 = scmp.eq.s32.totalorder %s19, 1
      %p58 = scmp.ne.s32.totalorder %s53, %s55
      %p59 = scmp.eq.s32.totalorder %s19, 0
      %p60 = por %p58, %p59
      %p61 = scmp.ne.s32.totalorder %s53, %s55
      %p62 = scmp.eq.s32.totalorder %s24, 1
      %p63 = por %p61, %p62
      %p64 = scmp.ne.s32.totalorder %s55, %s56
      %p65 = scmp.eq.s32.totalorder %s24, 0
      %p66 = por %p64, %p65
      %p67 = scmp.ne.s32.totalorder %s55, %s56
      %p68 = scmp.eq.s32.totalorder %s25, 1
      %p69 = por %p67, %p68
      %p71 = scmp.ne.s32.totalorder %s56, %s70
      %p72 = scmp.eq.s32.totalorder %s25, 0
      %p73 = por %p71, %p72
      %s75 = sadd.s32 %s74, 1
      %p78 = scmp.eq.s32.totalorder %s19, 1
      %p79 = scmp.ne.s32.totalorder %s74, %s76
      %p80 = scmp.eq.s32.totalorder %s19, 0
      %p81 = por %p79, %p80
      %p82 = scmp.ne.s32.totalorder %s74, %s76
      %p83 = scmp.eq.s32.totalorder %s24, 1
      %p84 = por %p82, %p83
      %p85 = scmp.ne.s32.totalorder %s76, %s77
      %p86 = scmp.eq.s32.totalorder %s24, 0
      %p87 = por %p85, %p86
      %p88 = scmp.ne.s32.totalorder %s76, %s77
      %p89 = scmp.eq.s32.totalorder %s25, 1
      %p90 = por %p88, %p89
      %p92 = scmp.ne.s32.totalorder %s77, %s91
      %p93 = scmp.eq.s32.totalorder %s25, 0
      %p94 = por %p92, %p93
      %s96 = sadd.s32 %s95, 1
      %p99 = scmp.eq.s32.totalorder %s19, 1
      %p100 = scmp.ne.s32.totalorder %s95, %s97
      %p101 = scmp.eq.s32.totalorder %s19, 0
      %p102 = por %p100, %p101
      %p103 = scmp.ne.s32.totalorder %s95, %s97
      %p104 = scmp.eq.s32.totalorder %s24, 1
      %p105 = por %p103, %p104
      %p106 = scmp.ne.s32.totalorder %s97, %s98
      %p107 = scmp.eq.s32.totalorder %s24, 0
      %p108 = por %p106, %p107
      %p109 = scmp.ne.s32.totalorder %s97, %s98
      %p110 = scmp.eq.s32.totalorder %s25, 1
      %p111 = por %p109, %p110
      %p113 = scmp.ne.s32.totalorder %s98, %s112
      %p114 = scmp.eq.s32.totalorder %s25, 0
      %p115 = por %p113, %p114
      %s117 = sadd.s32 %s116, 1
      %p120 = scmp.eq.s32.totalorder %s19, 1
      %p121 = scmp.ne.s32.totalorder %s116, %s118
      %p122 = scmp.eq.s32.totalorder %s19, 0
      %p123 = por %p121, %p122
      %p124 = scmp.ne.s32.totalorder %s116, %s118
      %p125 = scmp.eq.s32.totalorder %s24, 1
      %p126 = por %p124, %p125
      %p127 = scmp.ne.s32.totalorder %s118, %s119
      %p128 = scmp.eq.s32.totalorder %s24, 0
      %p129 = por %p127, %p128
      %p130 = scmp.ne.s32.totalorder %s118, %s119
      %p131 = scmp.eq.s32.totalorder %s25, 1
      %p132 = por %p130, %p131
      %p134 = scmp.ne.s32.totalorder %s119, %s133
      %p135 = scmp.eq.s32.totalorder %s25, 0
      %p136 = por %p134, %p135
      %s138 = sadd.s32 %s137, 1
      %p141 = scmp.eq.s32.totalorder %s19, 1
      %p142 = scmp.ne.s32.totalorder %s137, %s139
      %p143 = scmp.eq.s32.totalorder %s19, 0
      %p144 = por %p142, %p143
      %p145 = scmp.ne.s32.totalorder %s137, %s139
      %p146 = scmp.eq.s32.totalorder %s24, 1
      %p147 = por %p145, %p146
      %p148 = scmp.ne.s32.totalorder %s139, %s140
      %p149 = scmp.eq.s32.totalorder %s24, 0
      %p150 = por %p148, %p149
      %p151 = scmp.ne.s32.totalorder %s139, %s140
      %p152 = scmp.eq.s32.totalorder %s25, 1
      %p153 = por %p151, %p152
      %p155 = scmp.ne.s32.totalorder %s140, %s154
      %p156 = scmp.eq.s32.totalorder %s25, 0
      %p157 = por %p155, %p156
      %s159 = sadd.s32 %s158, 1
      %p162 = scmp.eq.s32.totalorder %s19, 1
      %p163 = scmp.ne.s32.totalorder %s158, %s160
      %p164 = scmp.eq.s32.totalorder %s19, 0
      %p165 = por %p163, %p164
      %p166 = scmp.ne.s32.totalorder %s158, %s160
      %p167 = scmp.eq.s32.totalorder %s24, 1
      %p168 = por %p166, %p167
      %p169 = scmp.ne.s32.totalorder %s160, %s161
      %p170 = scmp.eq.s32.totalorder %s24, 0
      %p171 = por %p169, %p170
      %p172 = scmp.ne.s32.totalorder %s160, %s161
      %p173 = scmp.eq.s32.totalorder %s25, 1
      %p174 = por %p172, %p173
      %p176 = scmp.ne.s32.totalorder %s161, %s175
      %p177 = scmp.eq.s32.totalorder %s25, 0
      %p178 = por %p176, %p177
      %s179 = ssub.s32 %s19, %s26
      %p180 = scmp.eq.s32.totalorder %s179, 0
      %s182 = sadd.s32 %s181, 1
      %s183 = scalar_select %p180, %s181, %s182
      %p186 = pneg %p180
      %p187 = scmp.eq.s32.totalorder %s19, 1
      %p188 = por %p186, %p187
      %p189 = scmp.ne.s32.totalorder %s181, %s184
      %p190 = scmp.eq.s32.totalorder %s19, 0
      %p191 = por %p189, %p190
      %p192 = scmp.ne.s32.totalorder %s181, %s184
      %p193 = scmp.eq.s32.totalorder %s24, 1
      %p194 = por %p192, %p193
      %p195 = scmp.ne.s32.totalorder %s184, %s185
      %p196 = scmp.eq.s32.totalorder %s24, 0
      %p197 = por %p195, %p196
      %p198 = scmp.ne.s32.totalorder %s184, %s185
      %p199 = scmp.eq.s32.totalorder %s25, 1
      %p200 = por %p198, %p199
      %p202 = scmp.ne.s32.totalorder %s185, %s201
      %p203 = scmp.eq.s32.totalorder %s25, 0
      %p204 = por %p202, %p203
      %p205 = scmp.le.s32.totalorder 1, %s19
      %p206 = scmp.lt.s32.totalorder %s19, 3
      %p207 = pnand %p205, %p206
      %p208 = pneg %p207
      // Predicated region
      $region9: #{tpu_custom_call.1} parent=5 // pred_check
        _
      $region10: #{tpu_custom_call.1} parent=5 // pred_check_branch
        %210 = sbr.rel (%p207) target = $region12
      $region11: #{tpu_custom_call.1} parent=5 // pred_region
        %s211 = ssub.s32 %s19, 1
        // Predicated region
        $region13: #{tpu_custom_call.1} parent=11 // pred_check
          %p212 = pneg %p66
        $region14: #{tpu_custom_call.1} parent=11 // pred_check_branch
          %214 = sbr.rel (%p212) target = $region16
        $region15: #{tpu_custom_call.1} parent=11 // pred_region
          _
        $region16: #{tpu_custom_call.1} parent=11 // pred_fallthru
          _
        // Predicated region
        $region17: #{tpu_custom_call.1} parent=11 // pred_check
          %p215 = pneg %p87
        $region18: #{tpu_custom_call.1} parent=11 // pred_check_branch
          %217 = sbr.rel (%p215) target = $region20
        $region19: #{tpu_custom_call.1} parent=11 // pred_region
          _
        $region20: #{tpu_custom_call.1} parent=11 // pred_fallthru
          _
        // Predicated region
        $region21: #{tpu_custom_call.1} parent=11 // pred_check
          %p218 = pneg %p108
        $region22: #{tpu_custom_call.1} parent=11 // pred_check_branch
          %220 = sbr.rel (%p218) target = $region24
        $region23: #{tpu_custom_call.1} parent=11 // pred_region
          _
        $region24: #{tpu_custom_call.1} parent=11 // pred_fallthru
          _
        // Predicated region
        $region25: #{tpu_custom_call.1} parent=11 // pred_check
          %p221 = pneg %p129
        $region26: #{tpu_custom_call.1} parent=11 // pred_check_branch
          %223 = sbr.rel (%p221) target = $region28
        $region27: #{tpu_custom_call.1} parent=11 // pred_region
          _
        $region28: #{tpu_custom_call.1} parent=11 // pred_fallthru
          _
        // Predicated region
        $region29: #{tpu_custom_call.1} parent=11 // pred_check
          %p224 = pneg %p150
        $region30: #{tpu_custom_call.1} parent=11 // pred_check_branch
          %226 = sbr.rel (%p224) target = $region32
        $region31: #{tpu_custom_call.1} parent=11 // pred_region
          _
        $region32: #{tpu_custom_call.1} parent=11 // pred_fallthru
          _
        // Predicated region
        $region33: #{tpu_custom_call.1} parent=11 // pred_check
          %p227 = pneg %p171
        $region34: #{tpu_custom_call.1} parent=11 // pred_check_branch
          %229 = sbr.rel (%p227) target = $region36
        $region35: #{tpu_custom_call.1} parent=11 // pred_region
          _
        $region36: #{tpu_custom_call.1} parent=11 // pred_fallthru
          _
      $region12: #{tpu_custom_call.1} parent=5 // pred_fallthru
        _
      %p230 = scmp.lt.s32.totalorder %s19, 2
      // Predicated region
      $region37: #{tpu_custom_call.1} parent=5 // pred_check
        %p231 = pneg %p230
      $region38: #{tpu_custom_call.1} parent=5 // pred_check_branch
        %233 = sbr.rel (%p231) target = $region40
      $region39: #{tpu_custom_call.1} parent=5 // pred_region
        // Predicated region
        $region41: #{tpu_custom_call.1} parent=39 // pred_check
          %p234 = pneg %p39
        $region42: #{tpu_custom_call.1} parent=39 // pred_check_branch
          %236 = sbr.rel (%p234) target = $region44
        $region43: #{tpu_custom_call.1} parent=39 // pred_region
          %s237 = sand.u32 %s29, 1
          %s238 = scalar_lea.sflag [#allocation4], %s237
          %s239 = sand.u32 %s29, 1
          %s240 = smul.addr %s239, 256
          %s241 = scalar_lea.vmem [#allocation3], %s240
          %s243 = ssub.s32 4096, 4096
          %244 = vsyncadd %s238, %s243
          %s245 = smul.addr %s19, 32
          %s246 = smul.addr %s245, 128
          %s247 = scalar_lea.hbm %s0, %s246
          %s248 = sshll.u32 %s241, 4
          %s249 = int_to_ptr.vmem [resolvable:$true] %s248
          %254 = dma.hbm_to_vmem [thread:$0]  %s247, 4096, %s249, %s238, 128, 128, 8
        $region44: #{tpu_custom_call.1} parent=39 // pred_fallthru
          _
      $region40: #{tpu_custom_call.1} parent=5 // pred_fallthru
        _
      %p255 = scmp.le.s32.totalorder 1, %s19
      %p256 = scmp.lt.s32.totalorder %s19, 3
      %p257 = pnand %p255, %p256
      %p258 = pneg %p257
      // Predicated region
      $region45: #{tpu_custom_call.1} parent=5 // pred_check
        _
      $region46: #{tpu_custom_call.1} parent=5 // pred_check_branch
        %260 = sbr.rel (%p257) target = $region48
      $region47: #{tpu_custom_call.1} parent=5 // pred_region
        %s261 = ssub.s32 %s19, 1
        %s262 = sand.u32 %s32, 1
        %s263 = scalar_lea.sflag [#allocation4], %s262
        %s264 = sand.u32 %s32, 1
        %s265 = smul.addr %s264, 256
        %s266 = scalar_lea.vmem [#allocation3], %s265
        // Predicated region
        $region49: #{tpu_custom_call.1} parent=47 // pred_check
          %p267 = pneg %p45
        $region50: #{tpu_custom_call.1} parent=47 // pred_check_branch
          %269 = sbr.rel (%p267) target = $region52
        $region51: #{tpu_custom_call.1} parent=47 // pred_region
          %270 = dma.done %s263, 4096
        $region52: #{tpu_custom_call.1} parent=47 // pred_fallthru
          _
        %s271 = sand.u32 %s32, 1
        %s272 = scalar_lea.sflag [#allocation4], %s271
        %s273 = sand.u32 %s32, 1
        %s274 = smul.addr %s273, 256
        %s275 = scalar_lea.vmem [#allocation3], %s274
        %p276 = pneg %p45
        %p277 = pneg %p42
        %p278 = pneg %p66
        %p279 = pneg %p63
        %p280 = pneg %p87
        %p281 = pneg %p84
        %p282 = pneg %p108
        %p283 = pneg %p105
        %p284 = pneg %p129
        %p285 = pneg %p126
        %p286 = pneg %p150
        %p287 = pneg %p147
        %p288 = pneg %p171
        %p289 = pneg %p168
        %p290 = pneg %p197
        %p291 = pneg %p194
        %s292 = sand.u32 %s184, 1
        %s293 = scalar_lea.sflag [#allocation5], %s292
        %s294 = sand.u32 %s184, 1
        %s295 = smul.addr %s294, 256
        %s296 = scalar_lea.vmem [#allocation6], %s295
        %v298 = vld [vmem:[%s266] sm:$0xff]
        %v299 = vld [vmem:[%s266 + $0x8] sm:$0xff]
        %v300 = vld [vmem:[%s266 + $0x10] sm:$0xff]
        %v301 = vld [vmem:[%s266 + $0x18] sm:$0xff]
        %v302 = vld [vmem:[%s266 + $0x20] sm:$0xff]
        %v303 = vld [vmem:[%s266 + $0x28] sm:$0xff]
        %v304 = vld [vmem:[%s266 + $0x30] sm:$0xff]
        %v305 = vld [vmem:[%s266 + $0x38] sm:$0xff]
        %v306 = vld [vmem:[%s266 + $0x40] sm:$0xff]
        %v307 = vld [vmem:[%s266 + $0x48] sm:$0xff]
        %v308 = vld [vmem:[%s266 + $0x50] sm:$0xff]
        %v309 = vld [vmem:[%s266 + $0x58] sm:$0xff]
        %v310 = vld [vmem:[%s266 + $0x60] sm:$0xff]
        %v311 = vld [vmem:[%s266 + $0x68] sm:$0xff]
        %v312 = vld [vmem:[%s266 + $0x70] sm:$0xff]
        %v313 = vld [vmem:[%s266 + $0x78] sm:$0xff]
        %v314 = vld [vmem:[%s266 + $0x80] sm:$0xff]
        %v315 = vld [vmem:[%s266 + $0x88] sm:$0xff]
        %v316 = vld [vmem:[%s266 + $0x90] sm:$0xff]
        %v317 = vld [vmem:[%s266 + $0x98] sm:$0xff]
        %v318 = vld [vmem:[%s266 + $0xa0] sm:$0xff]
        %v319 = vld [vmem:[%s266 + $0xa8] sm:$0xff]
        %v320 = vld [vmem:[%s266 + $0xb0] sm:$0xff]
        %v321 = vld [vmem:[%s266 + $0xb8] sm:$0xff]
        %v322 = vld [vmem:[%s266 + $0xc0] sm:$0xff]
        %v323 = vld [vmem:[%s266 + $0xc8] sm:$0xff]
        %v324 = vld [vmem:[%s266 + $0xd0] sm:$0xff]
        %v325 = vld [vmem:[%s266 + $0xd8] sm:$0xff]
        %v326 = vld [vmem:[%s266 + $0xe0] sm:$0xff]
        %v327 = vld [vmem:[%s266 + $0xe8] sm:$0xff]
        %v328 = vld [vmem:[%s266 + $0xf0] sm:$0xff]
        %v329 = vld [vmem:[%s266 + $0xf8] sm:$0xff]
        %v330 = vpack.c.bf16 %v299, %v298
        %v331 = vpack.c.bf16 %v301, %v300
        %v332 = vpack.c.bf16 %v303, %v302
        %v333 = vpack.c.bf16 %v305, %v304
        %v334 = vpack.c.bf16 %v307, %v306
        %v335 = vpack.c.bf16 %v309, %v308
        %v336 = vpack.c.bf16 %v311, %v310
        %v337 = vpack.c.bf16 %v313, %v312
        %v338 = vpack.c.bf16 %v315, %v314
        %v339 = vpack.c.bf16 %v317, %v316
        %v340 = vpack.c.bf16 %v319, %v318
        %v341 = vpack.c.bf16 %v321, %v320
        %v342 = vpack.c.bf16 %v323, %v322
        %v343 = vpack.c.bf16 %v325, %v324
        %v344 = vpack.c.bf16 %v327, %v326
        %v345 = vpack.c.bf16 %v329, %v328
        %v346 = vld [vmem:[%s1] sm:$0xf]
        %v347 = vld [vmem:[%s1 + $0x4] sm:$0xf]
        %v348 = vld [vmem:[%s1 + $0x8] sm:$0xf]
        %v349 = vld [vmem:[%s1 + $0xc] sm:$0xf]
        %v350 = vld [vmem:[%s1 + $0x10] sm:$0xf]
        %v351 = vld [vmem:[%s1 + $0x14] sm:$0xf]
        %v352 = vld [vmem:[%s1 + $0x18] sm:$0xf]
        %v353 = vld [vmem:[%s1 + $0x1c] sm:$0xf]
        %v354 = vld [vmem:[%s1 + $0x20] sm:$0xf]
        %v355 = vld [vmem:[%s1 + $0x24] sm:$0xf]
        %v356 = vld [vmem:[%s1 + $0x28] sm:$0xf]
        %v357 = vld [vmem:[%s1 + $0x2c] sm:$0xf]
        %v358 = vld [vmem:[%s1 + $0x30] sm:$0xf]
        %v359 = vld [vmem:[%s1 + $0x34] sm:$0xf]
        %v360 = vld [vmem:[%s1 + $0x38] sm:$0xf]
        %v361 = vld [vmem:[%s1 + $0x3c] sm:$0xf]
        %v362 = vld [vmem:[%s2] sm:$0x1]
        %v364 = vlaneseq
        %v365 = vshrl.u32 %v364, 7
        %v366 = vsub.s32 0, %v365
        %v367 = vrot.slane %v362, %v366
        %v385 = vunpack.c.l.b16 %v346
        %v386 = vunpack.c.l.b16 %v347
        %v387 = vunpack.c.l.b16 %v348
        %v388 = vunpack.c.l.b16 %v349
        %v389 = vunpack.c.l.b16 %v350
        %v390 = vunpack.c.l.b16 %v351
        %v391 = vunpack.c.l.b16 %v352
        %v392 = vunpack.c.l.b16 %v353
        %v393 = vunpack.c.l.b16 %v354
        %v394 = vunpack.c.l.b16 %v355
        %v395 = vunpack.c.l.b16 %v356
        %v396 = vunpack.c.l.b16 %v357
        %v397 = vunpack.c.l.b16 %v358
        %v398 = vunpack.c.l.b16 %v359
        %v399 = vunpack.c.l.b16 %v360
        %v400 = vunpack.c.l.b16 %v361
        %v401 = vpack.c.b16 %v386, %v385
        %v402 = vpack.c.b16 %v388, %v387
        %v403 = vpack.c.b16 %v390, %v389
        %v404 = vpack.c.b16 %v392, %v391
        %v405 = vpack.c.b16 %v394, %v393
        %v406 = vpack.c.b16 %v396, %v395
        %v407 = vpack.c.b16 %v398, %v397
        %v408 = vpack.c.b16 %v400, %v399
        %417 = vmatprep.subr.bf16.mxu0 0
        %418 = vmatpush1.bf16.msra.mxu0 %v408
        %419 = vmatprep.subr.bf16.mxu0 0
        %420 = vmatpush1.bf16.msra.mxu0 %v407
        %421 = vmatprep.subr.bf16.mxu0 0
        %422 = vmatpush1.bf16.msra.mxu0 %v406
        %423 = vmatprep.subr.bf16.mxu0 0
        %424 = vmatpush1.bf16.msra.mxu0 %v405
        %425 = vmatprep.subr.bf16.mxu0 0
        %426 = vmatpush1.bf16.msra.mxu0 %v404
        %427 = vmatprep.subr.bf16.mxu0 0
        %428 = vmatpush1.bf16.msra.mxu0 %v403
        %429 = vmatprep.subr.bf16.mxu0 0
        %430 = vmatpush1.bf16.msra.mxu0 %v402
        %431 = vmatprep.subr.bf16.mxu0 0
        %432 = vmatpush1.bf16.msra.mxu0 %v401
        %433 = vmatprep.subr.bf16.mxu0 0
        %434 = vmatpush2.bf16.msra.mxu0 0
        %435 = vmatprep.subr.bf16.mxu0 0
        %436 = vmatpush2.bf16.msra.mxu0 0
        %437 = vmatprep.subr.bf16.mxu0 0
        %438 = vmatpush2.bf16.msra.mxu0 0
        %439 = vmatprep.subr.bf16.mxu0 0
        %440 = vmatpush2.bf16.msra.mxu0 0
        %441 = vmatprep.subr.bf16.mxu0 0
        %442 = vmatpush2.bf16.msra.mxu0 0
        %443 = vmatprep.subr.bf16.mxu0 0
        %444 = vmatpush2.bf16.msra.mxu0 0
        %445 = vmatprep.subr.bf16.mxu0 0
        %446 = vmatpush2.bf16.msra.mxu0 0
        %447 = vmatprep.subr.bf16.mxu0 0
        %448 = vmatpush2.bf16.msra.mxu0 0
        %449 = vmatprep.mubr.bf16.mxu0 0
        %450 = vmatmul.mubr.bf16.gmra.mxu0 %v330
        %v451 = vpop.f32.mrf.mxu0
        %v452 = vadd.f32 %v367, %v451
        %v453 = vpop.f32.mrf.mxu0
        %v454 = vpop.f32.mrf.mxu0
        %v455 = vadd.f32 %v367, %v454
        %v456 = vpop.f32.mrf.mxu0
        %457 = vmatprep.mubr.bf16.mxu0 0
        %458 = vmatmul.mubr.bf16.gmra.mxu0 %v331
        %v459 = vpop.f32.mrf.mxu0
        %v460 = vadd.f32 %v367, %v459
        %v461 = vpop.f32.mrf.mxu0
        %v462 = vpop.f32.mrf.mxu0
        %v463 = vadd.f32 %v367, %v462
        %v464 = vpop.f32.mrf.mxu0
        %465 = vmatprep.mubr.bf16.mxu0 0
        %466 = vmatmul.mubr.bf16.gmra.mxu0 %v332
        %v467 = vpop.f32.mrf.mxu0
        %v468 = vadd.f32 %v367, %v467
        %v469 = vpop.f32.mrf.mxu0
        %v470 = vpop.f32.mrf.mxu0
        %v471 = vadd.f32 %v367, %v470
        %v472 = vpop.f32.mrf.mxu0
        %473 = vmatprep.mubr.bf16.mxu0 0
        %474 = vmatmul.mubr.bf16.gmra.mxu0 %v333
        %v475 = vpop.f32.mrf.mxu0
        %v476 = vadd.f32 %v367, %v475
        %v477 = vpop.f32.mrf.mxu0
        %v478 = vpop.f32.mrf.mxu0
        %v479 = vadd.f32 %v367, %v478
        %v480 = vpop.f32.mrf.mxu0
        %481 = vmatprep.mubr.bf16.mxu0 0
        %482 = vmatmul.mubr.bf16.gmra.mxu0 %v334
        %v483 = vpop.f32.mrf.mxu0
        %v484 = vadd.f32 %v367, %v483
        %v485 = vpop.f32.mrf.mxu0
        %v486 = vpop.f32.mrf.mxu0
        %v487 = vadd.f32 %v367, %v486
        %v488 = vpop.f32.mrf.mxu0
        %489 = vmatprep.mubr.bf16.mxu0 0
        %490 = vmatmul.mubr.bf16.gmra.mxu0 %v335
        %v491 = vpop.f32.mrf.mxu0
        %v492 = vadd.f32 %v367, %v491
        %v493 = vpop.f32.mrf.mxu0
        %v494 = vpop.f32.mrf.mxu0
        %v495 = vadd.f32 %v367, %v494
        %v496 = vpop.f32.mrf.mxu0
        %497 = vmatprep.mubr.bf16.mxu0 0
        %498 = vmatmul.mubr.bf16.gmra.mxu0 %v336
        %v499 = vpop.f32.mrf.mxu0
        %v500 = vadd.f32 %v367, %v499
        %v501 = vpop.f32.mrf.mxu0
        %v502 = vpop.f32.mrf.mxu0
        %v503 = vadd.f32 %v367, %v502
        %v504 = vpop.f32.mrf.mxu0
        %505 = vmatprep.mubr.bf16.mxu0 0
        %506 = vmatmul.mubr.bf16.gmra.mxu0 %v337
        %v507 = vpop.f32.mrf.mxu0
        %v508 = vadd.f32 %v367, %v507
        %v509 = vpop.f32.mrf.mxu0
        %v510 = vpop.f32.mrf.mxu0
        %v511 = vadd.f32 %v367, %v510
        %v512 = vpop.f32.mrf.mxu0
        %513 = vmatprep.mubr.bf16.mxu0 0
        %514 = vmatmul.mubr.bf16.gmra.mxu0 %v338
        %v515 = vpop.f32.mrf.mxu0
        %v516 = vadd.f32 %v367, %v515
        %v517 = vpop.f32.mrf.mxu0
        %v518 = vpop.f32.mrf.mxu0
        %v519 = vadd.f32 %v367, %v518
        %v520 = vpop.f32.mrf.mxu0
        %521 = vmatprep.mubr.bf16.mxu0 0
        %522 = vmatmul.mubr.bf16.gmra.mxu0 %v339
        %v523 = vpop.f32.mrf.mxu0
        %v524 = vadd.f32 %v367, %v523
        %v525 = vpop.f32.mrf.mxu0
        %v526 = vpop.f32.mrf.mxu0
        %v527 = vadd.f32 %v367, %v526
        %v528 = vpop.f32.mrf.mxu0
        %529 = vmatprep.mubr.bf16.mxu0 0
        %530 = vmatmul.mubr.bf16.gmra.mxu0 %v340
        %v531 = vpop.f32.mrf.mxu0
        %v532 = vadd.f32 %v367, %v531
        %v533 = vpop.f32.mrf.mxu0
        %v534 = vpop.f32.mrf.mxu0
        %v535 = vadd.f32 %v367, %v534
        %v536 = vpop.f32.mrf.mxu0
        %537 = vmatprep.mubr.bf16.mxu0 0
        %538 = vmatmul.mubr.bf16.gmra.mxu0 %v341
        %v539 = vpop.f32.mrf.mxu0
        %v540 = vadd.f32 %v367, %v539
        %v541 = vpop.f32.mrf.mxu0
        %v542 = vpop.f32.mrf.mxu0
        %v543 = vadd.f32 %v367, %v542
        %v544 = vpop.f32.mrf.mxu0
        %545 = vmatprep.mubr.bf16.mxu0 0
        %546 = vmatmul.mubr.bf16.gmra.mxu0 %v342
        %v547 = vpop.f32.mrf.mxu0
        %v548 = vadd.f32 %v367, %v547
        %v549 = vpop.f32.mrf.mxu0
        %v550 = vpop.f32.mrf.mxu0
        %v551 = vadd.f32 %v367, %v550
        %v552 = vpop.f32.mrf.mxu0
        %553 = vmatprep.mubr.bf16.mxu0 0
        %554 = vmatmul.mubr.bf16.gmra.mxu0 %v343
        %v555 = vpop.f32.mrf.mxu0
        %v556 = vadd.f32 %v367, %v555
        %v557 = vpop.f32.mrf.mxu0
        %v558 = vpop.f32.mrf.mxu0
        %v559 = vadd.f32 %v367, %v558
        %v560 = vpop.f32.mrf.mxu0
        %561 = vmatprep.mubr.bf16.mxu0 0
        %562 = vmatmul.mubr.bf16.gmra.mxu0 %v344
        %v563 = vpop.f32.mrf.mxu0
        %v564 = vadd.f32 %v367, %v563
        %v565 = vpop.f32.mrf.mxu0
        %v566 = vpop.f32.mrf.mxu0
        %v567 = vadd.f32 %v367, %v566
        %v568 = vpop.f32.mrf.mxu0
        %569 = vmatprep.mubr.bf16.mxu0 0
        %570 = vmatmul.mubr.bf16.gmra.mxu0 %v345
        %v571 = vpop.f32.mrf.mxu0
        %v572 = vadd.f32 %v367, %v571
        %v573 = vpop.f32.mrf.mxu0
        %v574 = vpop.f32.mrf.mxu0
        %v575 = vadd.f32 %v367, %v574
        %v576 = vpop.f32.mrf.mxu0
        %577 = vdwg.mxu0
        %v578 = vmax.f32 %v452, 0.0
        %v579 = vmax.f32 %v455, 0.0
        %v580 = vmax.f32 %v460, 0.0
        %v581 = vmax.f32 %v463, 0.0
        %v582 = vmax.f32 %v468, 0.0
        %v583 = vmax.f32 %v471, 0.0
        %v584 = vmax.f32 %v476, 0.0
        %v585 = vmax.f32 %v479, 0.0
        %v586 = vmax.f32 %v484, 0.0
        %v587 = vmax.f32 %v487, 0.0
        %v588 = vmax.f32 %v492, 0.0
        %v589 = vmax.f32 %v495, 0.0
        %v590 = vmax.f32 %v500, 0.0
        %v591 = vmax.f32 %v503, 0.0
        %v592 = vmax.f32 %v508, 0.0
        %v593 = vmax.f32 %v511, 0.0
        %v594 = vmax.f32 %v516, 0.0
        %v595 = vmax.f32 %v519, 0.0
        %v596 = vmax.f32 %v524, 0.0
        %v597 = vmax.f32 %v527, 0.0
        %v598 = vmax.f32 %v532, 0.0
        %v599 = vmax.f32 %v535, 0.0
        %v600 = vmax.f32 %v540, 0.0
        %v601 = vmax.f32 %v543, 0.0
        %v602 = vmax.f32 %v548, 0.0
        %v603 = vmax.f32 %v551, 0.0
        %v604 = vmax.f32 %v556, 0.0
        %v605 = vmax.f32 %v559, 0.0
        %v606 = vmax.f32 %v564, 0.0
        %v607 = vmax.f32 %v567, 0.0
        %v608 = vmax.f32 %v572, 0.0
        %v609 = vmax.f32 %v575, 0.0
        %vm610 = vcmask 261120
        %611 = vst.msk [vmem:[#allocation2] sm:$0xff] %vm610, 0.0
        %612 = vst.msk [vmem:[#allocation2 + $0x8] sm:$0xff] %vm610, 0.0
        %vm613 = vcmask 254976
        %614 = vst.msk [vmem:[#allocation2 + $0x10] sm:$0x3] %vm613, 0.0
        %s615 = scalar_lea.vmem [#allocation2], 408
        %616 = vst.msk [vmem:[%s615] sm:$0xff] %vm610, 0.0
        %617 = vst.msk [vmem:[%s615 + $0x8] sm:$0xff] %vm610, 0.0
        %618 = vst.msk [vmem:[%s615 + $0x10] sm:$0x3] %vm613, 0.0
        %s619 = scalar_lea.vmem [#allocation2], 24
        %vm620 = vcmask 253952
        %621 = vst.msk [vmem:[%s619] sm:$0x1] %vm620, 0.0
        %622 = vst.msk [vmem:[%s619 + $0x18] sm:$0x1] %vm620, 0.0
        %623 = vst.msk [vmem:[%s619 + $0x30] sm:$0x1] %vm620, 0.0
        %624 = vst.msk [vmem:[%s619 + $0x48] sm:$0x1] %vm620, 0.0
        %625 = vst.msk [vmem:[%s619 + $0x60] sm:$0x1] %vm620, 0.0
        %626 = vst.msk [vmem:[%s619 + $0x78] sm:$0x1] %vm620, 0.0
        %627 = vst.msk [vmem:[%s619 + $0x90] sm:$0x1] %vm620, 0.0
        %628 = vst.msk [vmem:[%s619 + $0xa8] sm:$0x1] %vm620, 0.0
        %629 = vst.msk [vmem:[%s619 + $0xc0] sm:$0x1] %vm620, 0.0
        %630 = vst.msk [vmem:[%s619 + $0xd8] sm:$0x1] %vm620, 0.0
        %631 = vst.msk [vmem:[%s619 + $0xf0] sm:$0x1] %vm620, 0.0
        %632 = vst.msk [vmem:[%s619 + $0x108] sm:$0x1] %vm620, 0.0
        %633 = vst.msk [vmem:[%s619 + $0x120] sm:$0x1] %vm620, 0.0
        %634 = vst.msk [vmem:[%s619 + $0x138] sm:$0x1] %vm620, 0.0
        %635 = vst.msk [vmem:[%s619 + $0x150] sm:$0x1] %vm620, 0.0
        %636 = vst.msk [vmem:[%s619 + $0x168] sm:$0x1] %vm620, 0.0
        %637 = vst.msk [vmem:[%s619 + $0x11] sm:$0x1] %vm620, 0.0
        %638 = vst.msk [vmem:[%s619 + $0x29] sm:$0x1] %vm620, 0.0
        %639 = vst.msk [vmem:[%s619 + $0x41] sm:$0x1] %vm620, 0.0
        %640 = vst.msk [vmem:[%s619 + $0x59] sm:$0x1] %vm620, 0.0
        %641 = vst.msk [vmem:[%s619 + $0x71] sm:$0x1] %vm620, 0.0
        %642 = vst.msk [vmem:[%s619 + $0x89] sm:$0x1] %vm620, 0.0
        %643 = vst.msk [vmem:[%s619 + $0xa1] sm:$0x1] %vm620, 0.0
        %644 = vst.msk [vmem:[%s619 + $0xb9] sm:$0x1] %vm620, 0.0
        %645 = vst.msk [vmem:[%s619 + $0xd1] sm:$0x1] %vm620, 0.0
        %646 = vst.msk [vmem:[%s619 + $0xe9] sm:$0x1] %vm620, 0.0
        %647 = vst.msk [vmem:[%s619 + $0x101] sm:$0x1] %vm620, 0.0
        %648 = vst.msk [vmem:[%s619 + $0x119] sm:$0x1] %vm620, 0.0
        %649 = vst.msk [vmem:[%s619 + $0x131] sm:$0x1] %vm620, 0.0
        %650 = vst.msk [vmem:[%s619 + $0x149] sm:$0x1] %vm620, 0.0
        %651 = vst.msk [vmem:[%s619 + $0x161] sm:$0x1] %vm620, 0.0
        %652 = vst.msk [vmem:[%s619 + $0x179] sm:$0x1] %vm620, 0.0
        %653 = vst.msk [vmem:[%s619 + $0x1] sm:$0xff] %vm610, %v578
        %654 = vst.msk [vmem:[%s619 + $0x9] sm:$0xff] %vm610, %v579
        %655 = vst.msk [vmem:[%s619 + $0x19] sm:$0xff] %vm610, %v580
        %656 = vst.msk [vmem:[%s619 + $0x21] sm:$0xff] %vm610, %v581
        %657 = vst.msk [vmem:[%s619 + $0x31] sm:$0xff] %vm610, %v582
        %658 = vst.msk [vmem:[%s619 + $0x39] sm:$0xff] %vm610, %v583
        %659 = vst.msk [vmem:[%s619 + $0x49] sm:$0xff] %vm610, %v584
        %660 = vst.msk [vmem:[%s619 + $0x51] sm:$0xff] %vm610, %v585
        %661 = vst.msk [vmem:[%s619 + $0x61] sm:$0xff] %vm610, %v586
        %662 = vst.msk [vmem:[%s619 + $0x69] sm:$0xff] %vm610, %v587
        %663 = vst.msk [vmem:[%s619 + $0x79] sm:$0xff] %vm610, %v588
        %664 = vst.msk [vmem:[%s619 + $0x81] sm:$0xff] %vm610, %v589
        %665 = vst.msk [vmem:[%s619 + $0x91] sm:$0xff] %vm610, %v590
        %666 = vst.msk [vmem:[%s619 + $0x99] sm:$0xff] %vm610, %v591
        %667 = vst.msk [vmem:[%s619 + $0xa9] sm:$0xff] %vm610, %v592
        %668 = vst.msk [vmem:[%s619 + $0xb1] sm:$0xff] %vm610, %v593
        %669 = vst.msk [vmem:[%s619 + $0xc1] sm:$0xff] %vm610, %v594
        %670 = vst.msk [vmem:[%s619 + $0xc9] sm:$0xff] %vm610, %v595
        %671 = vst.msk [vmem:[%s619 + $0xd9] sm:$0xff] %vm610, %v596
        %672 = vst.msk [vmem:[%s619 + $0xe1] sm:$0xff] %vm610, %v597
        %673 = vst.msk [vmem:[%s619 + $0xf1] sm:$0xff] %vm610, %v598
        %674 = vst.msk [vmem:[%s619 + $0xf9] sm:$0xff] %vm610, %v599
        %675 = vst.msk [vmem:[%s619 + $0x109] sm:$0xff] %vm610, %v600
        %676 = vst.msk [vmem:[%s619 + $0x111] sm:$0xff] %vm610, %v601
        %677 = vst.msk [vmem:[%s619 + $0x121] sm:$0xff] %vm610, %v602
        %678 = vst.msk [vmem:[%s619 + $0x129] sm:$0xff] %vm610, %v603
        %679 = vst.msk [vmem:[%s619 + $0x139] sm:$0xff] %vm610, %v604
        %680 = vst.msk [vmem:[%s619 + $0x141] sm:$0xff] %vm610, %v605
        %681 = vst.msk [vmem:[%s619 + $0x151] sm:$0xff] %vm610, %v606
        %682 = vst.msk [vmem:[%s619 + $0x159] sm:$0xff] %vm610, %v607
        %683 = vst.msk [vmem:[%s619 + $0x169] sm:$0xff] %vm610, %v608
        %684 = vst.msk [vmem:[%s619 + $0x171] sm:$0xff] %vm610, %v609
        %v685 = vld [vmem:[#allocation2] sm:$0xff]
        %v686 = vld [vmem:[#allocation2 + $0x8] sm:$0xff]
        %v687 = vld [vmem:[#allocation2 + $0x10] sm:$0x3]
        %v688 = vld [vmem:[#allocation2 + $0x18] sm:$0xff]
        %v689 = vld [vmem:[#allocation2 + $0x20] sm:$0xff]
        %v690 = vld [vmem:[#allocation2 + $0x28] sm:$0x3]
        %v691 = vld [vmem:[#allocation2 + $0x30] sm:$0xff]
        %v692 = vld [vmem:[#allocation2 + $0x38] sm:$0xff]
        %v693 = vld [vmem:[#allocation2 + $0x40] sm:$0x3]
        %v694 = vld [vmem:[#allocation2 + $0x48] sm:$0xff]
        %v695 = vld [vmem:[#allocation2 + $0x50] sm:$0xff]
        %v696 = vld [vmem:[#allocation2 + $0x58] sm:$0x3]
        %v697 = vld [vmem:[#allocation2 + $0x60] sm:$0xff]
        %v698 = vld [vmem:[#allocation2 + $0x68] sm:$0xff]
        %v699 = vld [vmem:[#allocation2 + $0x70] sm:$0x3]
        %v700 = vld [vmem:[#allocation2 + $0x78] sm:$0xff]
        %v701 = vld [vmem:[#allocation2 + $0x80] sm:$0xff]
        %v702 = vld [vmem:[#allocation2 + $0x88] sm:$0x3]
        %v703 = vld [vmem:[#allocation2 + $0x90] sm:$0xff]
        %v704 = vld [vmem:[#allocation2 + $0x98] sm:$0xff]
        %v705 = vld [vmem:[#allocation2 + $0xa0] sm:$0x3]
        %v706 = vld [vmem:[#allocation2 + $0xa8] sm:$0xff]
        %v707 = vld [vmem:[#allocation2 + $0xb0] sm:$0xff]
        %v708 = vld [vmem:[#allocation2 + $0xb8] sm:$0x3]
        %v709 = vld [vmem:[#allocation2 + $0xc0] sm:$0xff]
        %v710 = vld [vmem:[#allocation2 + $0xc8] sm:$0xff]
        %v711 = vld [vmem:[#allocation2 + $0xd0] sm:$0x3]
        %v712 = vld [vmem:[#allocation2 + $0xd8] sm:$0xff]
        %v713 = vld [vmem:[#allocation2 + $0xe0] sm:$0xff]
        %v714 = vld [vmem:[#allocation2 + $0xe8] sm:$0x3]
        %v715 = vld [vmem:[#allocation2 + $0xf0] sm:$0xff]
        %v716 = vld [vmem:[#allocation2 + $0xf8] sm:$0xff]
        %v717 = vld [vmem:[#allocation2 + $0x100] sm:$0x3]
        %v718 = vld [vmem:[#allocation2 + $0x108] sm:$0xff]
        %v719 = vld [vmem:[#allocation2 + $0x110] sm:$0xff]
        %v720 = vld [vmem:[#allocation2 + $0x118] sm:$0x3]
        %v721 = vld [vmem:[#allocation2 + $0x120] sm:$0xff]
        %v722 = vld [vmem:[#allocation2 + $0x128] sm:$0xff]
        %v723 = vld [vmem:[#allocation2 + $0x130] sm:$0x3]
        %v724 = vld [vmem:[#allocation2 + $0x138] sm:$0xff]
        %v725 = vld [vmem:[#allocation2 + $0x140] sm:$0xff]
        %v726 = vld [vmem:[#allocation2 + $0x148] sm:$0x3]
        %v727 = vld [vmem:[#allocation2 + $0x150] sm:$0xff]
        %v728 = vld [vmem:[#allocation2 + $0x158] sm:$0xff]
        %v729 = vld [vmem:[#allocation2 + $0x160] sm:$0x3]
        %v730 = vld [vmem:[#allocation2 + $0x168] sm:$0xff]
        %v731 = vld [vmem:[#allocation2 + $0x170] sm:$0xff]
        %v732 = vld [vmem:[#allocation2 + $0x178] sm:$0x3]
        %v733 = vld [vmem:[#allocation2 + $0x180] sm:$0xff]
        %v734 = vld [vmem:[#allocation2 + $0x188] sm:$0xff]
        %v735 = vld [vmem:[#allocation2 + $0x190] sm:$0x3]
        %v736 = vld [vmem:[#allocation2 + $0x198] sm:$0xff]
        %v737 = vld [vmem:[#allocation2 + $0x1a0] sm:$0xff]
        %v738 = vld [vmem:[#allocation2 + $0x1a8] sm:$0x3]
        %vm787 = vcmask 1046528
        %v788 = vrot.slane %v685, 1
        %v789 = vrot.slane %v686, 1
        %v790 = vsel %vm787, %v788, %v789
        %v791 = vrot.slane %v687, 1
        %v792 = vsel %vm787, %v789, %v791
        %v793 = vrot.slane %v688, 1
        %v794 = vrot.slane %v689, 1
        %v795 = vsel %vm787, %v793, %v794
        %v796 = vrot.slane %v690, 1
        %v797 = vsel %vm787, %v794, %v796
        %v798 = vrot.slane %v691, 1
        %v799 = vrot.slane %v692, 1
        %v800 = vsel %vm787, %v798, %v799
        %v801 = vrot.slane %v693, 1
        %v802 = vsel %vm787, %v799, %v801
        %v803 = vrot.slane %v694, 1
        %v804 = vrot.slane %v695, 1
        %v805 = vsel %vm787, %v803, %v804
        %v806 = vrot.slane %v696, 1
        %v807 = vsel %vm787, %v804, %v806
        %v808 = vrot.slane %v697, 1
        %v809 = vrot.slane %v698, 1
        %v810 = vsel %vm787, %v808, %v809
        %v811 = vrot.slane %v699, 1
        %v812 = vsel %vm787, %v809, %v811
        %v813 = vrot.slane %v700, 1
        %v814 = vrot.slane %v701, 1
        %v815 = vsel %vm787, %v813, %v814
        %v816 = vrot.slane %v702, 1
        %v817 = vsel %vm787, %v814, %v816
        %v818 = vrot.slane %v703, 1
        %v819 = vrot.slane %v704, 1
        %v820 = vsel %vm787, %v818, %v819
        %v821 = vrot.slane %v705, 1
        %v822 = vsel %vm787, %v819, %v821
        %v823 = vrot.slane %v706, 1
        %v824 = vrot.slane %v707, 1
        %v825 = vsel %vm787, %v823, %v824
        %v826 = vrot.slane %v708, 1
        %v827 = vsel %vm787, %v824, %v826
        %v828 = vrot.slane %v709, 1
        %v829 = vrot.slane %v710, 1
        %v830 = vsel %vm787, %v828, %v829
        %v831 = vrot.slane %v711, 1
        %v832 = vsel %vm787, %v829, %v831
        %v833 = vrot.slane %v712, 1
        %v834 = vrot.slane %v713, 1
        %v835 = vsel %vm787, %v833, %v834
        %v836 = vrot.slane %v714, 1
        %v837 = vsel %vm787, %v834, %v836
        %v838 = vrot.slane %v715, 1
        %v839 = vrot.slane %v716, 1
        %v840 = vsel %vm787, %v838, %v839
        %v841 = vrot.slane %v717, 1
        %v842 = vsel %vm787, %v839, %v841
        %v843 = vrot.slane %v718, 1
        %v844 = vrot.slane %v719, 1
        %v845 = vsel %vm787, %v843, %v844
        %v846 = vrot.slane %v720, 1
        %v847 = vsel %vm787, %v844, %v846
        %v848 = vrot.slane %v721, 1
        %v849 = vrot.slane %v722, 1
        %v850 = vsel %vm787, %v848, %v849
        %v851 = vrot.slane %v723, 1
        %v852 = vsel %vm787, %v849, %v851
        %v853 = vrot.slane %v724, 1
        %v854 = vrot.slane %v725, 1
        %v855 = vsel %vm787, %v853, %v854
        %v856 = vrot.slane %v726, 1
        %v857 = vsel %vm787, %v854, %v856
        %v858 = vrot.slane %v727, 1
        %v859 = vrot.slane %v728, 1
        %v860 = vsel %vm787, %v858, %v859
        %v861 = vrot.slane %v729, 1
        %v862 = vsel %vm787, %v859, %v861
        %v863 = vrot.slane %v730, 1
        %v864 = vrot.slane %v731, 1
        %v865 = vsel %vm787, %v863, %v864
        %v866 = vrot.slane %v732, 1
        %v867 = vsel %vm787, %v864, %v866
        %868 = vrot.lane.b32.xlu0 %v790, 32
        %v869 = vpop.permute.xlu0 %868
        %870 = vrot.lane.b32.xlu0 %v792, 32
        %v871 = vpop.permute.xlu0 %870
        %872 = vrot.lane.b32.xlu0 %v795, 32
        %v873 = vpop.permute.xlu0 %872
        %874 = vrot.lane.b32.xlu0 %v797, 32
        %v875 = vpop.permute.xlu0 %874
        %876 = vrot.lane.b32.xlu0 %v800, 32
        %v877 = vpop.permute.xlu0 %876
        %878 = vrot.lane.b32.xlu0 %v802, 32
        %v879 = vpop.permute.xlu0 %878
        %880 = vrot.lane.b32.xlu0 %v805, 32
        %v881 = vpop.permute.xlu0 %880
        %882 = vrot.lane.b32.xlu0 %v807, 32
        %v883 = vpop.permute.xlu0 %882
        %884 = vrot.lane.b32.xlu0 %v810, 32
        %v885 = vpop.permute.xlu0 %884
        %886 = vrot.lane.b32.xlu0 %v812, 32
        %v887 = vpop.permute.xlu0 %886
        %888 = vrot.lane.b32.xlu0 %v815, 32
        %v889 = vpop.permute.xlu0 %888
        %890 = vrot.lane.b32.xlu0 %v817, 32
        %v891 = vpop.permute.xlu0 %890
        %892 = vrot.lane.b32.xlu0 %v820, 32
        %v893 = vpop.permute.xlu0 %892
        %894 = vrot.lane.b32.xlu0 %v822, 32
        %v895 = vpop.permute.xlu0 %894
        %896 = vrot.lane.b32.xlu0 %v825, 32
        %v897 = vpop.permute.xlu0 %896
        %898 = vrot.lane.b32.xlu0 %v827, 32
        %v899 = vpop.permute.xlu0 %898
        %900 = vrot.lane.b32.xlu0 %v830, 32
        %v901 = vpop.permute.xlu0 %900
        %902 = vrot.lane.b32.xlu0 %v832, 32
        %v903 = vpop.permute.xlu0 %902
        %904 = vrot.lane.b32.xlu0 %v835, 32
        %v905 = vpop.permute.xlu0 %904
        %906 = vrot.lane.b32.xlu0 %v837, 32
        %v907 = vpop.permute.xlu0 %906
        %908 = vrot.lane.b32.xlu0 %v840, 32
        %v909 = vpop.permute.xlu0 %908
        %910 = vrot.lane.b32.xlu0 %v842, 32
        %v911 = vpop.permute.xlu0 %910
        %912 = vrot.lane.b32.xlu0 %v845, 32
        %v913 = vpop.permute.xlu0 %912
        %914 = vrot.lane.b32.xlu0 %v847, 32
        %v915 = vpop.permute.xlu0 %914
        %916 = vrot.lane.b32.xlu0 %v850, 32
        %v917 = vpop.permute.xlu0 %916
        %918 = vrot.lane.b32.xlu0 %v852, 32
        %v919 = vpop.permute.xlu0 %918
        %920 = vrot.lane.b32.xlu0 %v855, 32
        %v921 = vpop.permute.xlu0 %920
        %922 = vrot.lane.b32.xlu0 %v857, 32
        %v923 = vpop.permute.xlu0 %922
        %924 = vrot.lane.b32.xlu0 %v860, 32
        %v925 = vpop.permute.xlu0 %924
        %926 = vrot.lane.b32.xlu0 %v862, 32
        %v927 = vpop.permute.xlu0 %926
        %928 = vrot.lane.b32.xlu0 %v865, 32
        %v929 = vpop.permute.xlu0 %928
        %930 = vrot.lane.b32.xlu0 %v867, 32
        %v931 = vpop.permute.xlu0 %930
        %vm964 = vcmask 1045504
        %v965 = vrot.slane %v685, 2
        %v966 = vrot.slane %v686, 2
        %v967 = vsel %vm964, %v965, %v966
        %v968 = vrot.slane %v687, 2
        %v969 = vsel %vm964, %v966, %v968
        %v970 = vrot.slane %v688, 2
        %v971 = vrot.slane %v689, 2
        %v972 = vsel %vm964, %v970, %v971
        %v973 = vrot.slane %v690, 2
        %v974 = vsel %vm964, %v971, %v973
        %v975 = vrot.slane %v691, 2
        %v976 = vrot.slane %v692, 2
        %v977 = vsel %vm964, %v975, %v976
        %v978 = vrot.slane %v693, 2
        %v979 = vsel %vm964, %v976, %v978
        %v980 = vrot.slane %v694, 2
        %v981 = vrot.slane %v695, 2
        %v982 = vsel %vm964, %v980, %v981
        %v983 = vrot.slane %v696, 2
        %v984 = vsel %vm964, %v981, %v983
        %v985 = vrot.slane %v697, 2
        %v986 = vrot.slane %v698, 2
        %v987 = vsel %vm964, %v985, %v986
        %v988 = vrot.slane %v699, 2
        %v989 = vsel %vm964, %v986, %v988
        %v990 = vrot.slane %v700, 2
        %v991 = vrot.slane %v701, 2
        %v992 = vsel %vm964, %v990, %v991
        %v993 = vrot.slane %v702, 2
        %v994 = vsel %vm964, %v991, %v993
        %v995 = vrot.slane %v703, 2
        %v996 = vrot.slane %v704, 2
        %v997 = vsel %vm964, %v995, %v996
        %v998 = vrot.slane %v705, 2
        %v999 = vsel %vm964, %v996, %v998
        %v1000 = vrot.slane %v706, 2
        %v1001 = vrot.slane %v707, 2
        %v1002 = vsel %vm964, %v1000, %v1001
        %v1003 = vrot.slane %v708, 2
        %v1004 = vsel %vm964, %v1001, %v1003
        %v1005 = vrot.slane %v709, 2
        %v1006 = vrot.slane %v710, 2
        %v1007 = vsel %vm964, %v1005, %v1006
        %v1008 = vrot.slane %v711, 2
        %v1009 = vsel %vm964, %v1006, %v1008
        %v1010 = vrot.slane %v712, 2
        %v1011 = vrot.slane %v713, 2
        %v1012 = vsel %vm964, %v1010, %v1011
        %v1013 = vrot.slane %v714, 2
        %v1014 = vsel %vm964, %v1011, %v1013
        %v1015 = vrot.slane %v715, 2
        %v1016 = vrot.slane %v716, 2
        %v1017 = vsel %vm964, %v1015, %v1016
        %v1018 = vrot.slane %v717, 2
        %v1019 = vsel %vm964, %v1016, %v1018
        %v1020 = vrot.slane %v718, 2
        %v1021 = vrot.slane %v719, 2
        %v1022 = vsel %vm964, %v1020, %v1021
        %v1023 = vrot.slane %v720, 2
        %v1024 = vsel %vm964, %v1021, %v1023
        %v1025 = vrot.slane %v721, 2
        %v1026 = vrot.slane %v722, 2
        %v1027 = vsel %vm964, %v1025, %v1026
        %v1028 = vrot.slane %v723, 2
        %v1029 = vsel %vm964, %v1026, %v1028
        %v1030 = vrot.slane %v724, 2
        %v1031 = vrot.slane %v725, 2
        %v1032 = vsel %vm964, %v1030, %v1031
        %v1033 = vrot.slane %v726, 2
        %v1034 = vsel %vm964, %v1031, %v1033
        %v1035 = vrot.slane %v727, 2
        %v1036 = vrot.slane %v728, 2
        %v1037 = vsel %vm964, %v1035, %v1036
        %v1038 = vrot.slane %v729, 2
        %v1039 = vsel %vm964, %v1036, %v1038
        %v1040 = vrot.slane %v730, 2
        %v1041 = vrot.slane %v731, 2
        %v1042 = vsel %vm964, %v1040, %v1041
        %v1043 = vrot.slane %v732, 2
        %v1044 = vsel %vm964, %v1041, %v1043
        %1045 = vrot.lane.b32.xlu0 %v967, 64
        %v1046 = vpop.permute.xlu0 %1045
        %1047 = vrot.lane.b32.xlu0 %v969, 64
        %v1048 = vpop.permute.xlu0 %1047
        %1049 = vrot.lane.b32.xlu0 %v972, 64
        %v1050 = vpop.permute.xlu0 %1049
        %1051 = vrot.lane.b32.xlu0 %v974, 64
        %v1052 = vpop.permute.xlu0 %1051
        %1053 = vrot.lane.b32.xlu0 %v977, 64
        %v1054 = vpop.permute.xlu0 %1053
        %1055 = vrot.lane.b32.xlu0 %v979, 64
        %v1056 = vpop.permute.xlu0 %1055
        %1057 = vrot.lane.b32.xlu0 %v982, 64
        %v1058 = vpop.permute.xlu0 %1057
        %1059 = vrot.lane.b32.xlu0 %v984, 64
        %v1060 = vpop.permute.xlu0 %1059
        %1061 = vrot.lane.b32.xlu0 %v987, 64
        %v1062 = vpop.permute.xlu0 %1061
        %1063 = vrot.lane.b32.xlu0 %v989, 64
        %v1064 = vpop.permute.xlu0 %1063
        %1065 = vrot.lane.b32.xlu0 %v992, 64
        %v1066 = vpop.permute.xlu0 %1065
        %1067 = vrot.lane.b32.xlu0 %v994, 64
        %v1068 = vpop.permute.xlu0 %1067
        %1069 = vrot.lane.b32.xlu0 %v997, 64
        %v1070 = vpop.permute.xlu0 %1069
        %1071 = vrot.lane.b32.xlu0 %v999, 64
        %v1072 = vpop.permute.xlu0 %1071
        %1073 = vrot.lane.b32.xlu0 %v1002, 64
        %v1074 = vpop.permute.xlu0 %1073
        %1075 = vrot.lane.b32.xlu0 %v1004, 64
        %v1076 = vpop.permute.xlu0 %1075
        %1077 = vrot.lane.b32.xlu0 %v1007, 64
        %v1078 = vpop.permute.xlu0 %1077
        %1079 = vrot.lane.b32.xlu0 %v1009, 64
        %v1080 = vpop.permute.xlu0 %1079
        %1081 = vrot.lane.b32.xlu0 %v1012, 64
        %v1082 = vpop.permute.xlu0 %1081
        %1083 = vrot.lane.b32.xlu0 %v1014, 64
        %v1084 = vpop.permute.xlu0 %1083
        %1085 = vrot.lane.b32.xlu0 %v1017, 64
        %v1086 = vpop.permute.xlu0 %1085
        %1087 = vrot.lane.b32.xlu0 %v1019, 64
        %v1088 = vpop.permute.xlu0 %1087
        %1089 = vrot.lane.b32.xlu0 %v1022, 64
        %v1090 = vpop.permute.xlu0 %1089
        %1091 = vrot.lane.b32.xlu0 %v1024, 64
        %v1092 = vpop.permute.xlu0 %1091
        %1093 = vrot.lane.b32.xlu0 %v1027, 64
        %v1094 = vpop.permute.xlu0 %1093
        %1095 = vrot.lane.b32.xlu0 %v1029, 64
        %v1096 = vpop.permute.xlu0 %1095
        %1097 = vrot.lane.b32.xlu0 %v1032, 64
        %v1098 = vpop.permute.xlu0 %1097
        %1099 = vrot.lane.b32.xlu0 %v1034, 64
        %v1100 = vpop.permute.xlu0 %1099
        %1101 = vrot.lane.b32.xlu0 %v1037, 64
        %v1102 = vpop.permute.xlu0 %1101
        %1103 = vrot.lane.b32.xlu0 %v1039, 64
        %v1104 = vpop.permute.xlu0 %1103
        %1105 = vrot.lane.b32.xlu0 %v1042, 64
        %v1106 = vpop.permute.xlu0 %1105
        %1107 = vrot.lane.b32.xlu0 %v1044, 64
        %v1108 = vpop.permute.xlu0 %1107
        %1143 = vrot.lane.b32.xlu0 %v688, 96
        %v1144 = vpop.permute.xlu0 %1143
        %1145 = vrot.lane.b32.xlu0 %v689, 96
        %v1146 = vpop.permute.xlu0 %1145
        %1147 = vrot.lane.b32.xlu0 %v691, 96
        %v1148 = vpop.permute.xlu0 %1147
        %1149 = vrot.lane.b32.xlu0 %v692, 96
        %v1150 = vpop.permute.xlu0 %1149
        %1151 = vrot.lane.b32.xlu0 %v694, 96
        %v1152 = vpop.permute.xlu0 %1151
        %1153 = vrot.lane.b32.xlu0 %v695, 96
        %v1154 = vpop.permute.xlu0 %1153
        %1155 = vrot.lane.b32.xlu0 %v697, 96
        %v1156 = vpop.permute.xlu0 %1155
        %1157 = vrot.lane.b32.xlu0 %v698, 96
        %v1158 = vpop.permute.xlu0 %1157
        %1159 = vrot.lane.b32.xlu0 %v700, 96
        %v1160 = vpop.permute.xlu0 %1159
        %1161 = vrot.lane.b32.xlu0 %v701, 96
        %v1162 = vpop.permute.xlu0 %1161
        %1163 = vrot.lane.b32.xlu0 %v703, 96
        %v1164 = vpop.permute.xlu0 %1163
        %1165 = vrot.lane.b32.xlu0 %v704, 96
        %v1166 = vpop.permute.xlu0 %1165
        %1167 = vrot.lane.b32.xlu0 %v706, 96
        %v1168 = vpop.permute.xlu0 %1167
        %1169 = vrot.lane.b32.xlu0 %v707, 96
        %v1170 = vpop.permute.xlu0 %1169
        %1171 = vrot.lane.b32.xlu0 %v709, 96
        %v1172 = vpop.permute.xlu0 %1171
        %1173 = vrot.lane.b32.xlu0 %v710, 96
        %v1174 = vpop.permute.xlu0 %1173
        %1175 = vrot.lane.b32.xlu0 %v712, 96
        %v1176 = vpop.permute.xlu0 %1175
        %1177 = vrot.lane.b32.xlu0 %v713, 96
        %v1178 = vpop.permute.xlu0 %1177
        %1179 = vrot.lane.b32.xlu0 %v715, 96
        %v1180 = vpop.permute.xlu0 %1179
        %1181 = vrot.lane.b32.xlu0 %v716, 96
        %v1182 = vpop.permute.xlu0 %1181
        %1183 = vrot.lane.b32.xlu0 %v718, 96
        %v1184 = vpop.permute.xlu0 %1183
        %1185 = vrot.lane.b32.xlu0 %v719, 96
        %v1186 = vpop.permute.xlu0 %1185
        %1187 = vrot.lane.b32.xlu0 %v721, 96
        %v1188 = vpop.permute.xlu0 %1187
        %1189 = vrot.lane.b32.xlu0 %v722, 96
        %v1190 = vpop.permute.xlu0 %1189
        %1191 = vrot.lane.b32.xlu0 %v724, 96
        %v1192 = vpop.permute.xlu0 %1191
        %1193 = vrot.lane.b32.xlu0 %v725, 96
        %v1194 = vpop.permute.xlu0 %1193
        %1195 = vrot.lane.b32.xlu0 %v727, 96
        %v1196 = vpop.permute.xlu0 %1195
        %1197 = vrot.lane.b32.xlu0 %v728, 96
        %v1198 = vpop.permute.xlu0 %1197
        %1199 = vrot.lane.b32.xlu0 %v730, 96
        %v1200 = vpop.permute.xlu0 %1199
        %1201 = vrot.lane.b32.xlu0 %v731, 96
        %v1202 = vpop.permute.xlu0 %1201
        %1203 = vrot.lane.b32.xlu0 %v733, 96
        %v1204 = vpop.permute.xlu0 %1203
        %1205 = vrot.lane.b32.xlu0 %v734, 96
        %v1206 = vpop.permute.xlu0 %1205
        %v1240 = vrot.slane %v733, 1
        %v1241 = vrot.slane %v734, 1
        %v1242 = vsel %vm787, %v1240, %v1241
        %v1243 = vrot.slane %v735, 1
        %v1244 = vsel %vm787, %v1241, %v1243
        %v1277 = vrot.slane %v733, 2
        %v1278 = vrot.slane %v734, 2
        %v1279 = vsel %vm964, %v1277, %v1278
        %v1280 = vrot.slane %v735, 2
        %v1281 = vsel %vm964, %v1278, %v1280
        %1282 = vrot.lane.b32.xlu0 %v972, 32
        %v1283 = vpop.permute.xlu0 %1282
        %1284 = vrot.lane.b32.xlu0 %v974, 32
        %v1285 = vpop.permute.xlu0 %1284
        %1286 = vrot.lane.b32.xlu0 %v977, 32
        %v1287 = vpop.permute.xlu0 %1286
        %1288 = vrot.lane.b32.xlu0 %v979, 32
        %v1289 = vpop.permute.xlu0 %1288
        %1290 = vrot.lane.b32.xlu0 %v982, 32
        %v1291 = vpop.permute.xlu0 %1290
        %1292 = vrot.lane.b32.xlu0 %v984, 32
        %v1293 = vpop.permute.xlu0 %1292
        %1294 = vrot.lane.b32.xlu0 %v987, 32
        %v1295 = vpop.permute.xlu0 %1294
        %1296 = vrot.lane.b32.xlu0 %v989, 32
        %v1297 = vpop.permute.xlu0 %1296
        %1298 = vrot.lane.b32.xlu0 %v992, 32
        %v1299 = vpop.permute.xlu0 %1298
        %1300 = vrot.lane.b32.xlu0 %v994, 32
        %v1301 = vpop.permute.xlu0 %1300
        %1302 = vrot.lane.b32.xlu0 %v997, 32
        %v1303 = vpop.permute.xlu0 %1302
        %1304 = vrot.lane.b32.xlu0 %v999, 32
        %v1305 = vpop.permute.xlu0 %1304
        %1306 = vrot.lane.b32.xlu0 %v1002, 32
        %v1307 = vpop.permute.xlu0 %1306
        %1308 = vrot.lane.b32.xlu0 %v1004, 32
        %v1309 = vpop.permute.xlu0 %1308
        %1310 = vrot.lane.b32.xlu0 %v1007, 32
        %v1311 = vpop.permute.xlu0 %1310
        %1312 = vrot.lane.b32.xlu0 %v1009, 32
        %v1313 = vpop.permute.xlu0 %1312
        %1314 = vrot.lane.b32.xlu0 %v1012, 32
        %v1315 = vpop.permute.xlu0 %1314
        %1316 = vrot.lane.b32.xlu0 %v1014, 32
        %v1317 = vpop.permute.xlu0 %1316
        %1318 = vrot.lane.b32.xlu0 %v1017, 32
        %v1319 = vpop.permute.xlu0 %1318
        %1320 = vrot.lane.b32.xlu0 %v1019, 32
        %v1321 = vpop.permute.xlu0 %1320
        %1322 = vrot.lane.b32.xlu0 %v1022, 32
        %v1323 = vpop.permute.xlu0 %1322
        %1324 = vrot.lane.b32.xlu0 %v1024, 32
        %v1325 = vpop.permute.xlu0 %1324
        %1326 = vrot.lane.b32.xlu0 %v1027, 32
        %v1327 = vpop.permute.xlu0 %1326
        %1328 = vrot.lane.b32.xlu0 %v1029, 32
        %v1329 = vpop.permute.xlu0 %1328
        %1330 = vrot.lane.b32.xlu0 %v1032, 32
        %v1331 = vpop.permute.xlu0 %1330
        %1332 = vrot.lane.b32.xlu0 %v1034, 32
        %v1333 = vpop.permute.xlu0 %1332
        %1334 = vrot.lane.b32.xlu0 %v1037, 32
        %v1335 = vpop.permute.xlu0 %1334
        %1336 = vrot.lane.b32.xlu0 %v1039, 32
        %v1337 = vpop.permute.xlu0 %1336
        %1338 = vrot.lane.b32.xlu0 %v1042, 32
        %v1339 = vpop.permute.xlu0 %1338
        %1340 = vrot.lane.b32.xlu0 %v1044, 32
        %v1341 = vpop.permute.xlu0 %1340
        %1342 = vrot.lane.b32.xlu0 %v1279, 32
        %v1343 = vpop.permute.xlu0 %1342
        %1344 = vrot.lane.b32.xlu0 %v1281, 32
        %v1345 = vpop.permute.xlu0 %1344
        %1380 = vrot.lane.b32.xlu0 %v691, 64
        %v1381 = vpop.permute.xlu0 %1380
        %1382 = vrot.lane.b32.xlu0 %v692, 64
        %v1383 = vpop.permute.xlu0 %1382
        %1384 = vrot.lane.b32.xlu0 %v694, 64
        %v1385 = vpop.permute.xlu0 %1384
        %1386 = vrot.lane.b32.xlu0 %v695, 64
        %v1387 = vpop.permute.xlu0 %1386
        %1388 = vrot.lane.b32.xlu0 %v697, 64
        %v1389 = vpop.permute.xlu0 %1388
        %1390 = vrot.lane.b32.xlu0 %v698, 64
        %v1391 = vpop.permute.xlu0 %1390
        %1392 = vrot.lane.b32.xlu0 %v700, 64
        %v1393 = vpop.permute.xlu0 %1392
        %1394 = vrot.lane.b32.xlu0 %v701, 64
        %v1395 = vpop.permute.xlu0 %1394
        %1396 = vrot.lane.b32.xlu0 %v703, 64
        %v1397 = vpop.permute.xlu0 %1396
        %1398 = vrot.lane.b32.xlu0 %v704, 64
        %v1399 = vpop.permute.xlu0 %1398
        %1400 = vrot.lane.b32.xlu0 %v706, 64
        %v1401 = vpop.permute.xlu0 %1400
        %1402 = vrot.lane.b32.xlu0 %v707, 64
        %v1403 = vpop.permute.xlu0 %1402
        %1404 = vrot.lane.b32.xlu0 %v709, 64
        %v1405 = vpop.permute.xlu0 %1404
        %1406 = vrot.lane.b32.xlu0 %v710, 64
        %v1407 = vpop.permute.xlu0 %1406
        %1408 = vrot.lane.b32.xlu0 %v712, 64
        %v1409 = vpop.permute.xlu0 %1408
        %1410 = vrot.lane.b32.xlu0 %v713, 64
        %v1411 = vpop.permute.xlu0 %1410
        %1412 = vrot.lane.b32.xlu0 %v715, 64
        %v1413 = vpop.permute.xlu0 %1412
        %1414 = vrot.lane.b32.xlu0 %v716, 64
        %v1415 = vpop.permute.xlu0 %1414
        %1416 = vrot.lane.b32.xlu0 %v718, 64
        %v1417 = vpop.permute.xlu0 %1416
        %1418 = vrot.lane.b32.xlu0 %v719, 64
        %v1419 = vpop.permute.xlu0 %1418
        %1420 = vrot.lane.b32.xlu0 %v721, 64
        %v1421 = vpop.permute.xlu0 %1420
        %1422 = vrot.lane.b32.xlu0 %v722, 64
        %v1423 = vpop.permute.xlu0 %1422
        %1424 = vrot.lane.b32.xlu0 %v724, 64
        %v1425 = vpop.permute.xlu0 %1424
        %1426 = vrot.lane.b32.xlu0 %v725, 64
        %v1427 = vpop.permute.xlu0 %1426
        %1428 = vrot.lane.b32.xlu0 %v727, 64
        %v1429 = vpop.permute.xlu0 %1428
        %1430 = vrot.lane.b32.xlu0 %v728, 64
        %v1431 = vpop.permute.xlu0 %1430
        %1432 = vrot.lane.b32.xlu0 %v730, 64
        %v1433 = vpop.permute.xlu0 %1432
        %1434 = vrot.lane.b32.xlu0 %v731, 64
        %v1435 = vpop.permute.xlu0 %1434
        %1436 = vrot.lane.b32.xlu0 %v733, 64
        %v1437 = vpop.permute.xlu0 %1436
        %1438 = vrot.lane.b32.xlu0 %v734, 64
        %v1439 = vpop.permute.xlu0 %1438
        %1440 = vrot.lane.b32.xlu0 %v736, 64
        %v1441 = vpop.permute.xlu0 %1440
        %1442 = vrot.lane.b32.xlu0 %v737, 64
        %v1443 = vpop.permute.xlu0 %1442
        %v1477 = vrot.slane %v736, 1
        %v1478 = vrot.slane %v737, 1
        %v1479 = vsel %vm787, %v1477, %v1478
        %v1480 = vrot.slane %v738, 1
        %v1481 = vsel %vm787, %v1478, %v1480
        %1482 = vrot.lane.b32.xlu0 %v800, 96
        %v1483 = vpop.permute.xlu0 %1482
        %1484 = vrot.lane.b32.xlu0 %v802, 96
        %v1485 = vpop.permute.xlu0 %1484
        %1486 = vrot.lane.b32.xlu0 %v805, 96
        %v1487 = vpop.permute.xlu0 %1486
        %1488 = vrot.lane.b32.xlu0 %v807, 96
        %v1489 = vpop.permute.xlu0 %1488
        %1490 = vrot.lane.b32.xlu0 %v810, 96
        %v1491 = vpop.permute.xlu0 %1490
        %1492 = vrot.lane.b32.xlu0 %v812, 96
        %v1493 = vpop.permute.xlu0 %1492
        %1494 = vrot.lane.b32.xlu0 %v815, 96
        %v1495 = vpop.permute.xlu0 %1494
        %1496 = vrot.lane.b32.xlu0 %v817, 96
        %v1497 = vpop.permute.xlu0 %1496
        %1498 = vrot.lane.b32.xlu0 %v820, 96
        %v1499 = vpop.permute.xlu0 %1498
        %1500 = vrot.lane.b32.xlu0 %v822, 96
        %v1501 = vpop.permute.xlu0 %1500
        %1502 = vrot.lane.b32.xlu0 %v825, 96
        %v1503 = vpop.permute.xlu0 %1502
        %1504 = vrot.lane.b32.xlu0 %v827, 96
        %v1505 = vpop.permute.xlu0 %1504
        %1506 = vrot.lane.b32.xlu0 %v830, 96
        %v1507 = vpop.permute.xlu0 %1506
        %1508 = vrot.lane.b32.xlu0 %v832, 96
        %v1509 = vpop.permute.xlu0 %1508
        %1510 = vrot.lane.b32.xlu0 %v835, 96
        %v1511 = vpop.permute.xlu0 %1510
        %1512 = vrot.lane.b32.xlu0 %v837, 96
        %v1513 = vpop.permute.xlu0 %1512
        %1514 = vrot.lane.b32.xlu0 %v840, 96
        %v1515 = vpop.permute.xlu0 %1514
        %1516 = vrot.lane.b32.xlu0 %v842, 96
        %v1517 = vpop.permute.xlu0 %1516
        %1518 = vrot.lane.b32.xlu0 %v845, 96
        %v1519 = vpop.permute.xlu0 %1518
        %1520 = vrot.lane.b32.xlu0 %v847, 96
        %v1521 = vpop.permute.xlu0 %1520
        %1522 = vrot.lane.b32.xlu0 %v850, 96
        %v1523 = vpop.permute.xlu0 %1522
        %1524 = vrot.lane.b32.xlu0 %v852, 96
        %v1525 = vpop.permute.xlu0 %1524
        %1526 = vrot.lane.b32.xlu0 %v855, 96
        %v1527 = vpop.permute.xlu0 %1526
        %1528 = vrot.lane.b32.xlu0 %v857, 96
        %v1529 = vpop.permute.xlu0 %1528
        %1530 = vrot.lane.b32.xlu0 %v860, 96
        %v1531 = vpop.permute.xlu0 %1530
        %1532 = vrot.lane.b32.xlu0 %v862, 96
        %v1533 = vpop.permute.xlu0 %1532
        %1534 = vrot.lane.b32.xlu0 %v865, 96
        %v1535 = vpop.permute.xlu0 %1534
        %1536 = vrot.lane.b32.xlu0 %v867, 96
        %v1537 = vpop.permute.xlu0 %1536
        %1538 = vrot.lane.b32.xlu0 %v1242, 96
        %v1539 = vpop.permute.xlu0 %1538
        %1540 = vrot.lane.b32.xlu0 %v1244, 96
        %v1541 = vpop.permute.xlu0 %1540
        %1542 = vrot.lane.b32.xlu0 %v1479, 96
        %v1543 = vpop.permute.xlu0 %1542
        %1544 = vrot.lane.b32.xlu0 %v1481, 96
        %v1545 = vpop.permute.xlu0 %1544
        %v1578 = vrot.slane %v736, 2
        %v1579 = vrot.slane %v737, 2
        %v1580 = vsel %vm964, %v1578, %v1579
        %v1581 = vrot.slane %v738, 2
        %v1582 = vsel %vm964, %v1579, %v1581
        %v1615 = vsel %vm610, %v685, %v869
        %v1616 = vsel %vm610, %v686, %v871
        %v1617 = vsel %vm610, %v688, %v873
        %v1618 = vsel %vm610, %v689, %v875
        %v1619 = vsel %vm610, %v691, %v877
        %v1620 = vsel %vm610, %v692, %v879
        %v1621 = vsel %vm610, %v694, %v881
        %v1622 = vsel %vm610, %v695, %v883
        %v1623 = vsel %vm610, %v697, %v885
        %v1624 = vsel %vm610, %v698, %v887
        %v1625 = vsel %vm610, %v700, %v889
        %v1626 = vsel %vm610, %v701, %v891
        %v1627 = vsel %vm610, %v703, %v893
        %v1628 = vsel %vm610, %v704, %v895
        %v1629 = vsel %vm610, %v706, %v897
        %v1630 = vsel %vm610, %v707, %v899
        %v1631 = vsel %vm610, %v709, %v901
        %v1632 = vsel %vm610, %v710, %v903
        %v1633 = vsel %vm610, %v712, %v905
        %v1634 = vsel %vm610, %v713, %v907
        %v1635 = vsel %vm610, %v715, %v909
        %v1636 = vsel %vm610, %v716, %v911
        %v1637 = vsel %vm610, %v718, %v913
        %v1638 = vsel %vm610, %v719, %v915
        %v1639 = vsel %vm610, %v721, %v917
        %v1640 = vsel %vm610, %v722, %v919
        %v1641 = vsel %vm610, %v724, %v921
        %v1642 = vsel %vm610, %v725, %v923
        %v1643 = vsel %vm610, %v727, %v925
        %v1644 = vsel %vm610, %v728, %v927
        %v1645 = vsel %vm610, %v730, %v929
        %v1646 = vsel %vm610, %v731, %v931
        %vm1647 = vcmask 523264
        %v1648 = vsel %vm1647, %v1615, %v1046
        %v1649 = vsel %vm1647, %v1616, %v1048
        %v1650 = vsel %vm1647, %v1617, %v1050
        %v1651 = vsel %vm1647, %v1618, %v1052
        %v1652 = vsel %vm1647, %v1619, %v1054
        %v1653 = vsel %vm1647, %v1620, %v1056
        %v1654 = vsel %vm1647, %v1621, %v1058
        %v1655 = vsel %vm1647, %v1622, %v1060
        %v1656 = vsel %vm1647, %v1623, %v1062
        %v1657 = vsel %vm1647, %v1624, %v1064
        %v1658 = vsel %vm1647, %v1625, %v1066
        %v1659 = vsel %vm1647, %v1626, %v1068
        %v1660 = vsel %vm1647, %v1627, %v1070
        %v1661 = vsel %vm1647, %v1628, %v1072
        %v1662 = vsel %vm1647, %v1629, %v1074
        %v1663 = vsel %vm1647, %v1630, %v1076
        %v1664 = vsel %vm1647, %v1631, %v1078
        %v1665 = vsel %vm1647, %v1632, %v1080
        %v1666 = vsel %vm1647, %v1633, %v1082
        %v1667 = vsel %vm1647, %v1634, %v1084
        %v1668 = vsel %vm1647, %v1635, %v1086
        %v1669 = vsel %vm1647, %v1636, %v1088
        %v1670 = vsel %vm1647, %v1637, %v1090
        %v1671 = vsel %vm1647, %v1638, %v1092
        %v1672 = vsel %vm1647, %v1639, %v1094
        %v1673 = vsel %vm1647, %v1640, %v1096
        %v1674 = vsel %vm1647, %v1641, %v1098
        %v1675 = vsel %vm1647, %v1642, %v1100
        %v1676 = vsel %vm1647, %v1643, %v1102
        %v1677 = vsel %vm1647, %v1644, %v1104
        %v1678 = vsel %vm1647, %v1645, %v1106
        %v1679 = vsel %vm1647, %v1646, %v1108
        %vm1680 = vcmask 785408
        %v1681 = vsel %vm1680, %v1648, %v1144
        %v1682 = vsel %vm1680, %v1649, %v1146
        %v1683 = vsel %vm1680, %v1650, %v1148
        %v1684 = vsel %vm1680, %v1651, %v1150
        %v1685 = vsel %vm1680, %v1652, %v1152
        %v1686 = vsel %vm1680, %v1653, %v1154
        %v1687 = vsel %vm1680, %v1654, %v1156
        %v1688 = vsel %vm1680, %v1655, %v1158
        %v1689 = vsel %vm1680, %v1656, %v1160
        %v1690 = vsel %vm1680, %v1657, %v1162
        %v1691 = vsel %vm1680, %v1658, %v1164
        %v1692 = vsel %vm1680, %v1659, %v1166
        %v1693 = vsel %vm1680, %v1660, %v1168
        %v1694 = vsel %vm1680, %v1661, %v1170
        %v1695 = vsel %vm1680, %v1662, %v1172
        %v1696 = vsel %vm1680, %v1663, %v1174
        %v1697 = vsel %vm1680, %v1664, %v1176
        %v1698 = vsel %vm1680, %v1665, %v1178
        %v1699 = vsel %vm1680, %v1666, %v1180
        %v1700 = vsel %vm1680, %v1667, %v1182
        %v1701 = vsel %vm1680, %v1668, %v1184
        %v1702 = vsel %vm1680, %v1669, %v1186
        %v1703 = vsel %vm1680, %v1670, %v1188
        %v1704 = vsel %vm1680, %v1671, %v1190
        %v1705 = vsel %vm1680, %v1672, %v1192
        %v1706 = vsel %vm1680, %v1673, %v1194
        %v1707 = vsel %vm1680, %v1674, %v1196
        %v1708 = vsel %vm1680, %v1675, %v1198
        %v1709 = vsel %vm1680, %v1676, %v1200
        %v1710 = vsel %vm1680, %v1677, %v1202
        %v1711 = vsel %vm1680, %v1678, %v1204
        %v1712 = vsel %vm1680, %v1679, %v1206
        %v1713 = vsel %vm610, %v795, %v1283
        %v1714 = vsel %vm610, %v797, %v1285
        %v1715 = vsel %vm610, %v800, %v1287
        %v1716 = vsel %vm610, %v802, %v1289
        %v1717 = vsel %vm610, %v805, %v1291
        %v1718 = vsel %vm610, %v807, %v1293
        %v1719 = vsel %vm610, %v810, %v1295
        %v1720 = vsel %vm610, %v812, %v1297
        %v1721 = vsel %vm610, %v815, %v1299
        %v1722 = vsel %vm610, %v817, %v1301
        %v1723 = vsel %vm610, %v820, %v1303
        %v1724 = vsel %vm610, %v822, %v1305
        %v1725 = vsel %vm610, %v825, %v1307
        %v1726 = vsel %vm610, %v827, %v1309
        %v1727 = vsel %vm610, %v830, %v1311
        %v1728 = vsel %vm610, %v832, %v1313
        %v1729 = vsel %vm610, %v835, %v1315
        %v1730 = vsel %vm610, %v837, %v1317
        %v1731 = vsel %vm610, %v840, %v1319
        %v1732 = vsel %vm610, %v842, %v1321
        %v1733 = vsel %vm610, %v845, %v1323
        %v1734 = vsel %vm610, %v847, %v1325
        %v1735 = vsel %vm610, %v850, %v1327
        %v1736 = vsel %vm610, %v852, %v1329
        %v1737 = vsel %vm610, %v855, %v1331
        %v1738 = vsel %vm610, %v857, %v1333
        %v1739 = vsel %vm610, %v860, %v1335
        %v1740 = vsel %vm610, %v862, %v1337
        %v1741 = vsel %vm610, %v865, %v1339
        %v1742 = vsel %vm610, %v867, %v1341
        %v1743 = vsel %vm610, %v1242, %v1343
        %v1744 = vsel %vm610, %v1244, %v1345
        %v1745 = vsel %vm1647, %v1713, %v1381
        %v1746 = vsel %vm1647, %v1714, %v1383
        %v1747 = vsel %vm1647, %v1715, %v1385
        %v1748 = vsel %vm1647, %v1716, %v1387
        %v1749 = vsel %vm1647, %v1717, %v1389
        %v1750 = vsel %vm1647, %v1718, %v1391
        %v1751 = vsel %vm1647, %v1719, %v1393
        %v1752 = vsel %vm1647, %v1720, %v1395
        %v1753 = vsel %vm1647, %v1721, %v1397
        %v1754 = vsel %vm1647, %v1722, %v1399
        %v1755 = vsel %vm1647, %v1723, %v1401
        %v1756 = vsel %vm1647, %v1724, %v1403
        %v1757 = vsel %vm1647, %v1725, %v1405
        %v1758 = vsel %vm1647, %v1726, %v1407
        %v1759 = vsel %vm1647, %v1727, %v1409
        %v1760 = vsel %vm1647, %v1728, %v1411
        %v1761 = vsel %vm1647, %v1729, %v1413
        %v1762 = vsel %vm1647, %v1730, %v1415
        %v1763 = vsel %vm1647, %v1731, %v1417
        %v1764 = vsel %vm1647, %v1732, %v1419
        %v1765 = vsel %vm1647, %v1733, %v1421
        %v1766 = vsel %vm1647, %v1734, %v1423
        %v1767 = vsel %vm1647, %v1735, %v1425
        %v1768 = vsel %vm1647, %v1736, %v1427
        %v1769 = vsel %vm1647, %v1737, %v1429
        %v1770 = vsel %vm1647, %v1738, %v1431
        %v1771 = vsel %vm1647, %v1739, %v1433
        %v1772 = vsel %vm1647, %v1740, %v1435
        %v1773 = vsel %vm1647, %v1741, %v1437
        %v1774 = vsel %vm1647, %v1742, %v1439
        %v1775 = vsel %vm1647, %v1743, %v1441
        %v1776 = vsel %vm1647, %v1744, %v1443
        %v1777 = vsel %vm1680, %v1745, %v1483
        %v1778 = vsel %vm1680, %v1746, %v1485
        %v1779 = vsel %vm1680, %v1747, %v1487
        %v1780 = vsel %vm1680, %v1748, %v1489
        %v1781 = vsel %vm1680, %v1749, %v1491
        %v1782 = vsel %vm1680, %v1750, %v1493
        %v1783 = vsel %vm1680, %v1751, %v1495
        %v1784 = vsel %vm1680, %v1752, %v1497
        %v1785 = vsel %vm1680, %v1753, %v1499
        %v1786 = vsel %vm1680, %v1754, %v1501
        %v1787 = vsel %vm1680, %v1755, %v1503
        %v1788 = vsel %vm1680, %v1756, %v1505
        %v1789 = vsel %vm1680, %v1757, %v1507
        %v1790 = vsel %vm1680, %v1758, %v1509
        %v1791 = vsel %vm1680, %v1759, %v1511
        %v1792 = vsel %vm1680, %v1760, %v1513
        %v1793 = vsel %vm1680, %v1761, %v1515
        %v1794 = vsel %vm1680, %v1762, %v1517
        %v1795 = vsel %vm1680, %v1763, %v1519
        %v1796 = vsel %vm1680, %v1764, %v1521
        %v1797 = vsel %vm1680, %v1765, %v1523
        %v1798 = vsel %vm1680, %v1766, %v1525
        %v1799 = vsel %vm1680, %v1767, %v1527
        %v1800 = vsel %vm1680, %v1768, %v1529
        %v1801 = vsel %vm1680, %v1769, %v1531
        %v1802 = vsel %vm1680, %v1770, %v1533
        %v1803 = vsel %vm1680, %v1771, %v1535
        %v1804 = vsel %vm1680, %v1772, %v1537
        %v1805 = vsel %vm1680, %v1773, %v1539
        %v1806 = vsel %vm1680, %v1774, %v1541
        %v1807 = vsel %vm1680, %v1775, %v1543
        %v1808 = vsel %vm1680, %v1776, %v1545
        %v1809 = vpack.c.bf16 %v1682, %v1681
        %v1810 = vpack.c.bf16 %v1778, %v1777
        %v1811 = vpack.c.bf16 %v979, %v977
        %v1812 = vpack.c.bf16 %v1684, %v1683
        %v1813 = vpack.c.bf16 %v1780, %v1779
        %v1814 = vpack.c.bf16 %v984, %v982
        %v1815 = vpack.c.bf16 %v1686, %v1685
        %v1816 = vpack.c.bf16 %v1782, %v1781
        %v1817 = vpack.c.bf16 %v989, %v987
        %v1818 = vpack.c.bf16 %v1688, %v1687
        %v1819 = vpack.c.bf16 %v1784, %v1783
        %v1820 = vpack.c.bf16 %v994, %v992
        %v1821 = vpack.c.bf16 %v1690, %v1689
        %v1822 = vpack.c.bf16 %v1786, %v1785
        %v1823 = vpack.c.bf16 %v999, %v997
        %v1824 = vpack.c.bf16 %v1692, %v1691
        %v1825 = vpack.c.bf16 %v1788, %v1787
        %v1826 = vpack.c.bf16 %v1004, %v1002
        %v1827 = vpack.c.bf16 %v1694, %v1693
        %v1828 = vpack.c.bf16 %v1790, %v1789
        %v1829 = vpack.c.bf16 %v1009, %v1007
        %v1830 = vpack.c.bf16 %v1696, %v1695
        %v1831 = vpack.c.bf16 %v1792, %v1791
        %v1832 = vpack.c.bf16 %v1014, %v1012
        %v1833 = vpack.c.bf16 %v1698, %v1697
        %v1834 = vpack.c.bf16 %v1794, %v1793
        %v1835 = vpack.c.bf16 %v1019, %v1017
        %v1836 = vpack.c.bf16 %v1700, %v1699
        %v1837 = vpack.c.bf16 %v1796, %v1795
        %v1838 = vpack.c.bf16 %v1024, %v1022
        %v1839 = vpack.c.bf16 %v1702, %v1701
        %v1840 = vpack.c.bf16 %v1798, %v1797
        %v1841 = vpack.c.bf16 %v1029, %v1027
        %v1842 = vpack.c.bf16 %v1704, %v1703
        %v1843 = vpack.c.bf16 %v1800, %v1799
        %v1844 = vpack.c.bf16 %v1034, %v1032
        %v1845 = vpack.c.bf16 %v1706, %v1705
        %v1846 = vpack.c.bf16 %v1802, %v1801
        %v1847 = vpack.c.bf16 %v1039, %v1037
        %v1848 = vpack.c.bf16 %v1708, %v1707
        %v1849 = vpack.c.bf16 %v1804, %v1803
        %v1850 = vpack.c.bf16 %v1044, %v1042
        %v1851 = vpack.c.bf16 %v1710, %v1709
        %v1852 = vpack.c.bf16 %v1806, %v1805
        %v1853 = vpack.c.bf16 %v1281, %v1279
        %v1854 = vpack.c.bf16 %v1712, %v1711
        %v1855 = vpack.c.bf16 %v1808, %v1807
        %v1856 = vpack.c.bf16 %v1582, %v1580
        %v1857 = vld [vmem:[%s3] sm:$0xf]
        %v1858 = vld [vmem:[%s3 + $0x4] sm:$0xf]
        %v1859 = vld [vmem:[%s3 + $0x8] sm:$0xf]
        %v1860 = vld [vmem:[%s3 + $0xc] sm:$0xf]
        %v1861 = vld [vmem:[%s3 + $0x10] sm:$0xf]
        %v1862 = vld [vmem:[%s3 + $0x14] sm:$0xf]
        %v1863 = vld [vmem:[%s3 + $0x18] sm:$0xf]
        %v1864 = vld [vmem:[%s3 + $0x1c] sm:$0xf]
        %v1865 = vld [vmem:[%s3 + $0x20] sm:$0xf]
        %v1866 = vld [vmem:[%s3 + $0x24] sm:$0xf]
        %v1867 = vld [vmem:[%s3 + $0x28] sm:$0xf]
        %v1868 = vld [vmem:[%s3 + $0x2c] sm:$0xf]
        %v1869 = vld [vmem:[%s3 + $0x30] sm:$0xf]
        %v1870 = vld [vmem:[%s3 + $0x34] sm:$0xf]
        %v1871 = vld [vmem:[%s3 + $0x38] sm:$0xf]
        %v1872 = vld [vmem:[%s3 + $0x3c] sm:$0xf]
        %v1873 = vld [vmem:[%s3 + $0x40] sm:$0xf]
        %v1874 = vld [vmem:[%s3 + $0x44] sm:$0xf]
        %v1875 = vld [vmem:[%s3 + $0x48] sm:$0xf]
        %v1876 = vld [vmem:[%s3 + $0x4c] sm:$0xf]
        %v1877 = vld [vmem:[%s3 + $0x50] sm:$0xf]
        %v1878 = vld [vmem:[%s3 + $0x54] sm:$0xf]
        %v1879 = vld [vmem:[%s3 + $0x58] sm:$0xf]
        %v1880 = vld [vmem:[%s3 + $0x5c] sm:$0xf]
        %v1881 = vld [vmem:[%s3 + $0x60] sm:$0xf]
        %v1882 = vld [vmem:[%s3 + $0x64] sm:$0xf]
        %v1883 = vld [vmem:[%s3 + $0x68] sm:$0xf]
        %v1884 = vld [vmem:[%s3 + $0x6c] sm:$0xf]
        %v1885 = vld [vmem:[%s3 + $0x70] sm:$0xf]
        %v1886 = vld [vmem:[%s3 + $0x74] sm:$0xf]
        %v1887 = vld [vmem:[%s3 + $0x78] sm:$0xf]
        %v1888 = vld [vmem:[%s3 + $0x7c] sm:$0xf]
        %v1889 = vld [vmem:[%s3 + $0x80] sm:$0xf]
        %v1890 = vld [vmem:[%s3 + $0x84] sm:$0xf]
        %v1891 = vld [vmem:[%s3 + $0x88] sm:$0xf]
        %v1892 = vld [vmem:[%s3 + $0x8c] sm:$0xf]
        %v1893 = vld [vmem:[%s4] sm:$0x1]
        %v1895 = vlaneseq
        %v1896 = vshrl.u32 %v1895, 7
        %v1897 = vsub.s32 0, %v1896
        %v1898 = vrot.slane %v1893, %v1897
        %v1936 = vunpack.c.l.b16 %v1857
        %v1937 = vunpack.c.l.b16 %v1858
        %v1938 = vunpack.c.l.b16 %v1859
        %v1939 = vunpack.c.l.b16 %v1860
        %v1940 = vunpack.c.l.b16 %v1861
        %v1941 = vunpack.c.l.b16 %v1862
        %v1942 = vunpack.c.l.b16 %v1863
        %v1943 = vunpack.c.l.b16 %v1864
        %v1944 = vunpack.c.l.b16 %v1865
        %v1945 = vunpack.c.l.b16 %v1866
        %v1946 = vunpack.c.l.b16 %v1867
        %v1947 = vunpack.c.l.b16 %v1868
        %v1948 = vunpack.c.l.b16 %v1869
        %v1949 = vunpack.c.l.b16 %v1870
        %v1950 = vunpack.c.l.b16 %v1871
        %v1951 = vunpack.c.l.b16 %v1872
        %v1952 = vunpack.c.l.b16 %v1873
        %v1953 = vunpack.c.l.b16 %v1874
        %v1954 = vunpack.c.l.b16 %v1875
        %v1955 = vunpack.c.l.b16 %v1876
        %v1956 = vunpack.c.l.b16 %v1877
        %v1957 = vunpack.c.l.b16 %v1878
        %v1958 = vunpack.c.l.b16 %v1879
        %v1959 = vunpack.c.l.b16 %v1880
        %v1960 = vunpack.c.l.b16 %v1881
        %v1961 = vunpack.c.l.b16 %v1882
        %v1962 = vunpack.c.l.b16 %v1883
        %v1963 = vunpack.c.l.b16 %v1884
        %v1964 = vunpack.c.l.b16 %v1885
        %v1965 = vunpack.c.l.b16 %v1886
        %v1966 = vunpack.c.l.b16 %v1887
        %v1967 = vunpack.c.l.b16 %v1888
        %v1968 = vunpack.c.l.b16 %v1889
        %v1969 = vunpack.c.l.b16 %v1890
        %v1970 = vunpack.c.l.b16 %v1891
        %v1971 = vunpack.c.l.b16 %v1892
        %v1972 = vpack.c.b16 %v1937, %v1936
        %v1973 = vpack.c.b16 %v1939, %v1938
        %v1974 = vpack.c.b16 %v1941, %v1940
        %v1975 = vpack.c.b16 %v1943, %v1942
        %v1976 = vpack.c.b16 %v1945, %v1944
        %v1977 = vpack.c.b16 %v1947, %v1946
        %v1978 = vpack.c.b16 %v1949, %v1948
        %v1979 = vpack.c.b16 %v1951, %v1950
        %v1980 = vpack.c.b16 %v1953, %v1952
        %v1981 = vpack.c.b16 %v1955, %v1954
        %v1982 = vpack.c.b16 %v1957, %v1956
        %v1983 = vpack.c.b16 %v1959, %v1958
        %v1984 = vpack.c.b16 %v1961, %v1960
        %v1985 = vpack.c.b16 %v1963, %v1962
        %v1986 = vpack.c.b16 %v1965, %v1964
        %v1987 = vpack.c.b16 %v1967, %v1966
        %v1988 = vpack.c.b16 %v1969, %v1968
        %v1989 = vpack.c.b16 %v1971, %v1970
        %v2009 = vsel %vm610, %v1811, 0
        %v2012 = vsel %vm610, %v1814, 0
        %v2015 = vsel %vm610, %v1817, 0
        %v2018 = vsel %vm610, %v1820, 0
        %v2021 = vsel %vm610, %v1823, 0
        %v2024 = vsel %vm610, %v1826, 0
        %v2027 = vsel %vm610, %v1829, 0
        %v2030 = vsel %vm610, %v1832, 0
        %v2033 = vsel %vm610, %v1835, 0
        %v2036 = vsel %vm610, %v1838, 0
        %v2039 = vsel %vm610, %v1841, 0
        %v2042 = vsel %vm610, %v1844, 0
        %v2045 = vsel %vm610, %v1847, 0
        %v2048 = vsel %vm610, %v1850, 0
        %v2051 = vsel %vm610, %v1853, 0
        %v2054 = vsel %vm610, %v1856, 0
        %2056 = vmatprep.subr.bf16.mxu0 0
        %2057 = vmatpush1.bf16.msra.mxu0 %v1979
        %2058 = vmatprep.subr.bf16.mxu0 0
        %2059 = vmatpush1.bf16.msra.mxu0 %v1978
        %2060 = vmatprep.subr.bf16.mxu0 0
        %2061 = vmatpush1.bf16.msra.mxu0 %v1977
        %2062 = vmatprep.subr.bf16.mxu0 0
        %2063 = vmatpush1.bf16.msra.mxu0 %v1976
        %2064 = vmatprep.subr.bf16.mxu0 0
        %2065 = vmatpush1.bf16.msra.mxu0 %v1975
        %2066 = vmatprep.subr.bf16.mxu0 0
        %2067 = vmatpush1.bf16.msra.mxu0 %v1974
        %2068 = vmatprep.subr.bf16.mxu0 0
        %2069 = vmatpush1.bf16.msra.mxu0 %v1973
        %2070 = vmatprep.subr.bf16.mxu0 0
        %2071 = vmatpush1.bf16.msra.mxu0 %v1972
        %2072 = vmatprep.subr.bf16.mxu0 0
        %2073 = vmatpush2.bf16.msra.mxu0 %v1987
        %2074 = vmatprep.subr.bf16.mxu0 0
        %2075 = vmatpush2.bf16.msra.mxu0 %v1986
        %2076 = vmatprep.subr.bf16.mxu0 0
        %2077 = vmatpush2.bf16.msra.mxu0 %v1985
        %2078 = vmatprep.subr.bf16.mxu0 0
        %2079 = vmatpush2.bf16.msra.mxu0 %v1984
        %2080 = vmatprep.subr.bf16.mxu0 0
        %2081 = vmatpush2.bf16.msra.mxu0 %v1983
        %2082 = vmatprep.subr.bf16.mxu0 0
        %2083 = vmatpush2.bf16.msra.mxu0 %v1982
        %2084 = vmatprep.subr.bf16.mxu0 0
        %2085 = vmatpush2.bf16.msra.mxu0 %v1981
        %2086 = vmatprep.subr.bf16.mxu0 0
        %2087 = vmatpush2.bf16.msra.mxu0 %v1980
        %2088 = vmatprep.mubr.bf16.mxu0 %v1810
        %2089 = vmatmul.mubr.bf16.gmra.mxu0 %v1809
        %v2090 = vpop.f32.mrf.mxu0
        %v2091 = vadd.f32 %v1898, %v2090
        %v2092 = vpop.f32.mrf.mxu0
        %v2093 = vpop.f32.mrf.mxu0
        %v2094 = vadd.f32 %v1898, %v2093
        %v2095 = vpop.f32.mrf.mxu0
        %2096 = vmatprep.mubr.bf16.mxu0 %v1813
        %2097 = vmatmul.mubr.bf16.gmra.mxu0 %v1812
        %v2098 = vpop.f32.mrf.mxu0
        %v2099 = vadd.f32 %v1898, %v2098
        %v2100 = vpop.f32.mrf.mxu0
        %v2101 = vpop.f32.mrf.mxu0
        %v2102 = vadd.f32 %v1898, %v2101
        %v2103 = vpop.f32.mrf.mxu0
        %2104 = vmatprep.mubr.bf16.mxu0 %v1816
        %2105 = vmatmul.mubr.bf16.gmra.mxu0 %v1815
        %v2106 = vpop.f32.mrf.mxu0
        %v2107 = vadd.f32 %v1898, %v2106
        %v2108 = vpop.f32.mrf.mxu0
        %v2109 = vpop.f32.mrf.mxu0
        %v2110 = vadd.f32 %v1898, %v2109
        %v2111 = vpop.f32.mrf.mxu0
        %2112 = vmatprep.mubr.bf16.mxu0 %v1819
        %2113 = vmatmul.mubr.bf16.gmra.mxu0 %v1818
        %v2114 = vpop.f32.mrf.mxu0
        %v2115 = vadd.f32 %v1898, %v2114
        %v2116 = vpop.f32.mrf.mxu0
        %v2117 = vpop.f32.mrf.mxu0
        %v2118 = vadd.f32 %v1898, %v2117
        %v2119 = vpop.f32.mrf.mxu0
        %2120 = vmatprep.mubr.bf16.mxu0 %v1822
        %2121 = vmatmul.mubr.bf16.gmra.mxu0 %v1821
        %v2122 = vpop.f32.mrf.mxu0
        %v2123 = vadd.f32 %v1898, %v2122
        %v2124 = vpop.f32.mrf.mxu0
        %v2125 = vpop.f32.mrf.mxu0
        %v2126 = vadd.f32 %v1898, %v2125
        %v2127 = vpop.f32.mrf.mxu0
        %2128 = vmatprep.mubr.bf16.mxu0 %v1825
        %2129 = vmatmul.mubr.bf16.gmra.mxu0 %v1824
        %v2130 = vpop.f32.mrf.mxu0
        %v2131 = vadd.f32 %v1898, %v2130
        %v2132 = vpop.f32.mrf.mxu0
        %v2133 = vpop.f32.mrf.mxu0
        %v2134 = vadd.f32 %v1898, %v2133
        %v2135 = vpop.f32.mrf.mxu0
        %2136 = vmatprep.mubr.bf16.mxu0 %v1828
        %2137 = vmatmul.mubr.bf16.gmra.mxu0 %v1827
        %v2138 = vpop.f32.mrf.mxu0
        %v2139 = vadd.f32 %v1898, %v2138
        %v2140 = vpop.f32.mrf.mxu0
        %v2141 = vpop.f32.mrf.mxu0
        %v2142 = vadd.f32 %v1898, %v2141
        %v2143 = vpop.f32.mrf.mxu0
        %2144 = vmatprep.mubr.bf16.mxu0 %v1831
        %2145 = vmatmul.mubr.bf16.gmra.mxu0 %v1830
        %v2146 = vpop.f32.mrf.mxu0
        %v2147 = vadd.f32 %v1898, %v2146
        %v2148 = vpop.f32.mrf.mxu0
        %v2149 = vpop.f32.mrf.mxu0
        %v2150 = vadd.f32 %v1898, %v2149
        %v2151 = vpop.f32.mrf.mxu0
        %2152 = vmatprep.mubr.bf16.mxu0 %v1834
        %2153 = vmatmul.mubr.bf16.gmra.mxu0 %v1833
        %v2154 = vpop.f32.mrf.mxu0
        %v2155 = vadd.f32 %v1898, %v2154
        %v2156 = vpop.f32.mrf.mxu0
        %v2157 = vpop.f32.mrf.mxu0
        %v2158 = vadd.f32 %v1898, %v2157
        %v2159 = vpop.f32.mrf.mxu0
        %2160 = vmatprep.mubr.bf16.mxu0 %v1837
        %2161 = vmatmul.mubr.bf16.gmra.mxu0 %v1836
        %v2162 = vpop.f32.mrf.mxu0
        %v2163 = vadd.f32 %v1898, %v2162
        %v2164 = vpop.f32.mrf.mxu0
        %v2165 = vpop.f32.mrf.mxu0
        %v2166 = vadd.f32 %v1898, %v2165
        %v2167 = vpop.f32.mrf.mxu0
        %2168 = vmatprep.mubr.bf16.mxu0 %v1840
        %2169 = vmatmul.mubr.bf16.gmra.mxu0 %v1839
        %v2170 = vpop.f32.mrf.mxu0
        %v2171 = vadd.f32 %v1898, %v2170
        %v2172 = vpop.f32.mrf.mxu0
        %v2173 = vpop.f32.mrf.mxu0
        %v2174 = vadd.f32 %v1898, %v2173
        %v2175 = vpop.f32.mrf.mxu0
        %2176 = vmatprep.mubr.bf16.mxu0 %v1843
        %2177 = vmatmul.mubr.bf16.gmra.mxu0 %v1842
        %v2178 = vpop.f32.mrf.mxu0
        %v2179 = vadd.f32 %v1898, %v2178
        %v2180 = vpop.f32.mrf.mxu0
        %v2181 = vpop.f32.mrf.mxu0
        %v2182 = vadd.f32 %v1898, %v2181
        %v2183 = vpop.f32.mrf.mxu0
        %2184 = vmatprep.mubr.bf16.mxu0 %v1846
        %2185 = vmatmul.mubr.bf16.gmra.mxu0 %v1845
        %v2186 = vpop.f32.mrf.mxu0
        %v2187 = vadd.f32 %v1898, %v2186
        %v2188 = vpop.f32.mrf.mxu0
        %v2189 = vpop.f32.mrf.mxu0
        %v2190 = vadd.f32 %v1898, %v2189
        %v2191 = vpop.f32.mrf.mxu0
        %2192 = vmatprep.mubr.bf16.mxu0 %v1849
        %2193 = vmatmul.mubr.bf16.gmra.mxu0 %v1848
        %v2194 = vpop.f32.mrf.mxu0
        %v2195 = vadd.f32 %v1898, %v2194
        %v2196 = vpop.f32.mrf.mxu0
        %v2197 = vpop.f32.mrf.mxu0
        %v2198 = vadd.f32 %v1898, %v2197
        %v2199 = vpop.f32.mrf.mxu0
        %2200 = vmatprep.mubr.bf16.mxu0 %v1852
        %2201 = vmatmul.mubr.bf16.gmra.mxu0 %v1851
        %v2202 = vpop.f32.mrf.mxu0
        %v2203 = vadd.f32 %v1898, %v2202
        %v2204 = vpop.f32.mrf.mxu0
        %v2205 = vpop.f32.mrf.mxu0
        %v2206 = vadd.f32 %v1898, %v2205
        %v2207 = vpop.f32.mrf.mxu0
        %2208 = vmatprep.mubr.bf16.mxu0 %v1855
        %2209 = vmatmul.mubr.bf16.gmra.mxu0 %v1854
        %v2210 = vpop.f32.mrf.mxu0
        %v2211 = vadd.f32 %v1898, %v2210
        %v2212 = vpop.f32.mrf.mxu0
        %v2213 = vpop.f32.mrf.mxu0
        %v2214 = vadd.f32 %v1898, %v2213
        %v2215 = vpop.f32.mrf.mxu0
        %2216 = vdwg.mxu0
        %2217 = vmatprep.subr.bf16.mxu0 0
        %2218 = vmatpush1.bf16.msra.mxu0 0
        %2219 = vmatprep.subr.bf16.mxu0 0
        %2220 = vmatpush1.bf16.msra.mxu0 0
        %2221 = vmatprep.subr.bf16.mxu0 0
        %2222 = vmatpush1.bf16.msra.mxu0 0
        %2223 = vmatprep.subr.bf16.mxu0 0
        %2224 = vmatpush1.bf16.msra.mxu0 0
        %2225 = vmatprep.subr.bf16.mxu0 0
        %2226 = vmatpush1.bf16.msra.mxu0 0
        %2227 = vmatprep.subr.bf16.mxu0 0
        %2228 = vmatpush1.bf16.msra.mxu0 0
        %2229 = vmatprep.subr.bf16.mxu0 0
        %2230 = vmatpush1.bf16.msra.mxu0 %v1989
        %2231 = vmatprep.subr.bf16.mxu0 0
        %2232 = vmatpush1.bf16.msra.mxu0 %v1988
        %2233 = vmatprep.subr.bf16.mxu0 0
        %2234 = vmatpush2.bf16.msra.mxu0 0
        %2235 = vmatprep.subr.bf16.mxu0 0
        %2236 = vmatpush2.bf16.msra.mxu0 0
        %2237 = vmatprep.subr.bf16.mxu0 0
        %2238 = vmatpush2.bf16.msra.mxu0 0
        %2239 = vmatprep.subr.bf16.mxu0 0
        %2240 = vmatpush2.bf16.msra.mxu0 0
        %2241 = vmatprep.subr.bf16.mxu0 0
        %2242 = vmatpush2.bf16.msra.mxu0 0
        %2243 = vmatprep.subr.bf16.mxu0 0
        %2244 = vmatpush2.bf16.msra.mxu0 0
        %2245 = vmatprep.subr.bf16.mxu0 0
        %2246 = vmatpush2.bf16.msra.mxu0 0
        %2247 = vmatprep.subr.bf16.mxu0 0
        %2248 = vmatpush2.bf16.msra.mxu0 0
        %2249 = vmatprep.mubr.bf16.mxu0 0
        %2250 = vmatmul.mubr.bf16.gmra.mxu0 %v2009
        %v2251 = vpop.f32.mrf.mxu0
        %v2252 = vadd.f32 %v2091, %v2251
        %v2253 = vpop.f32.mrf.mxu0
        %v2254 = vpop.f32.mrf.mxu0
        %v2255 = vadd.f32 %v2094, %v2254
        %v2256 = vpop.f32.mrf.mxu0
        %2257 = vmatprep.mubr.bf16.mxu0 0
        %2258 = vmatmul.mubr.bf16.gmra.mxu0 %v2012
        %v2259 = vpop.f32.mrf.mxu0
        %v2260 = vadd.f32 %v2099, %v2259
        %v2261 = vpop.f32.mrf.mxu0
        %v2262 = vpop.f32.mrf.mxu0
        %v2263 = vadd.f32 %v2102, %v2262
        %v2264 = vpop.f32.mrf.mxu0
        %2265 = vmatprep.mubr.bf16.mxu0 0
        %2266 = vmatmul.mubr.bf16.gmra.mxu0 %v2015
        %v2267 = vpop.f32.mrf.mxu0
        %v2268 = vadd.f32 %v2107, %v2267
        %v2269 = vpop.f32.mrf.mxu0
        %v2270 = vpop.f32.mrf.mxu0
        %v2271 = vadd.f32 %v2110, %v2270
        %v2272 = vpop.f32.mrf.mxu0
        %2273 = vmatprep.mubr.bf16.mxu0 0
        %2274 = vmatmul.mubr.bf16.gmra.mxu0 %v2018
        %v2275 = vpop.f32.mrf.mxu0
        %v2276 = vadd.f32 %v2115, %v2275
        %v2277 = vpop.f32.mrf.mxu0
        %v2278 = vpop.f32.mrf.mxu0
        %v2279 = vadd.f32 %v2118, %v2278
        %v2280 = vpop.f32.mrf.mxu0
        %2281 = vmatprep.mubr.bf16.mxu0 0
        %2282 = vmatmul.mubr.bf16.gmra.mxu0 %v2021
        %v2283 = vpop.f32.mrf.mxu0
        %v2284 = vadd.f32 %v2123, %v2283
        %v2285 = vpop.f32.mrf.mxu0
        %v2286 = vpop.f32.mrf.mxu0
        %v2287 = vadd.f32 %v2126, %v2286
        %v2288 = vpop.f32.mrf.mxu0
        %2289 = vmatprep.mubr.bf16.mxu0 0
        %2290 = vmatmul.mubr.bf16.gmra.mxu0 %v2024
        %v2291 = vpop.f32.mrf.mxu0
        %v2292 = vadd.f32 %v2131, %v2291
        %v2293 = vpop.f32.mrf.mxu0
        %v2294 = vpop.f32.mrf.mxu0
        %v2295 = vadd.f32 %v2134, %v2294
        %v2296 = vpop.f32.mrf.mxu0
        %2297 = vmatprep.mubr.bf16.mxu0 0
        %2298 = vmatmul.mubr.bf16.gmra.mxu0 %v2027
        %v2299 = vpop.f32.mrf.mxu0
        %v2300 = vadd.f32 %v2139, %v2299
        %v2301 = vpop.f32.mrf.mxu0
        %v2302 = vpop.f32.mrf.mxu0
        %v2303 = vadd.f32 %v2142, %v2302
        %v2304 = vpop.f32.mrf.mxu0
        %2305 = vmatprep.mubr.bf16.mxu0 0
        %2306 = vmatmul.mubr.bf16.gmra.mxu0 %v2030
        %v2307 = vpop.f32.mrf.mxu0
        %v2308 = vadd.f32 %v2147, %v2307
        %v2309 = vpop.f32.mrf.mxu0
        %v2310 = vpop.f32.mrf.mxu0
        %v2311 = vadd.f32 %v2150, %v2310
        %v2312 = vpop.f32.mrf.mxu0
        %2313 = vmatprep.mubr.bf16.mxu0 0
        %2314 = vmatmul.mubr.bf16.gmra.mxu0 %v2033
        %v2315 = vpop.f32.mrf.mxu0
        %v2316 = vadd.f32 %v2155, %v2315
        %v2317 = vpop.f32.mrf.mxu0
        %v2318 = vpop.f32.mrf.mxu0
        %v2319 = vadd.f32 %v2158, %v2318
        %v2320 = vpop.f32.mrf.mxu0
        %2321 = vmatprep.mubr.bf16.mxu0 0
        %2322 = vmatmul.mubr.bf16.gmra.mxu0 %v2036
        %v2323 = vpop.f32.mrf.mxu0
        %v2324 = vadd.f32 %v2163, %v2323
        %v2325 = vpop.f32.mrf.mxu0
        %v2326 = vpop.f32.mrf.mxu0
        %v2327 = vadd.f32 %v2166, %v2326
        %v2328 = vpop.f32.mrf.mxu0
        %2329 = vmatprep.mubr.bf16.mxu0 0
        %2330 = vmatmul.mubr.bf16.gmra.mxu0 %v2039
        %v2331 = vpop.f32.mrf.mxu0
        %v2332 = vadd.f32 %v2171, %v2331
        %v2333 = vpop.f32.mrf.mxu0
        %v2334 = vpop.f32.mrf.mxu0
        %v2335 = vadd.f32 %v2174, %v2334
        %v2336 = vpop.f32.mrf.mxu0
        %2337 = vmatprep.mubr.bf16.mxu0 0
        %2338 = vmatmul.mubr.bf16.gmra.mxu0 %v2042
        %v2339 = vpop.f32.mrf.mxu0
        %v2340 = vadd.f32 %v2179, %v2339
        %v2341 = vpop.f32.mrf.mxu0
        %v2342 = vpop.f32.mrf.mxu0
        %v2343 = vadd.f32 %v2182, %v2342
        %v2344 = vpop.f32.mrf.mxu0
        %2345 = vmatprep.mubr.bf16.mxu0 0
        %2346 = vmatmul.mubr.bf16.gmra.mxu0 %v2045
        %v2347 = vpop.f32.mrf.mxu0
        %v2348 = vadd.f32 %v2187, %v2347
        %v2349 = vpop.f32.mrf.mxu0
        %v2350 = vpop.f32.mrf.mxu0
        %v2351 = vadd.f32 %v2190, %v2350
        %v2352 = vpop.f32.mrf.mxu0
        %2353 = vmatprep.mubr.bf16.mxu0 0
        %2354 = vmatmul.mubr.bf16.gmra.mxu0 %v2048
        %v2355 = vpop.f32.mrf.mxu0
        %v2356 = vadd.f32 %v2195, %v2355
        %v2357 = vpop.f32.mrf.mxu0
        %v2358 = vpop.f32.mrf.mxu0
        %v2359 = vadd.f32 %v2198, %v2358
        %v2360 = vpop.f32.mrf.mxu0
        %2361 = vmatprep.mubr.bf16.mxu0 0
        %2362 = vmatmul.mubr.bf16.gmra.mxu0 %v2051
        %v2363 = vpop.f32.mrf.mxu0
        %v2364 = vadd.f32 %v2203, %v2363
        %v2365 = vpop.f32.mrf.mxu0
        %v2366 = vpop.f32.mrf.mxu0
        %v2367 = vadd.f32 %v2206, %v2366
        %v2368 = vpop.f32.mrf.mxu0
        %2369 = vmatprep.mubr.bf16.mxu0 0
        %2370 = vmatmul.mubr.bf16.gmra.mxu0 %v2054
        %v2371 = vpop.f32.mrf.mxu0
        %v2372 = vadd.f32 %v2211, %v2371
        %v2373 = vpop.f32.mrf.mxu0
        %v2374 = vpop.f32.mrf.mxu0
        %v2375 = vadd.f32 %v2214, %v2374
        %v2376 = vpop.f32.mrf.mxu0
        %2377 = vdwg.mxu0
        %v2378 = vmax.f32 %v2252, 0.0
        %v2379 = vmax.f32 %v2255, 0.0
        %v2380 = vmax.f32 %v2260, 0.0
        %v2381 = vmax.f32 %v2263, 0.0
        %v2382 = vmax.f32 %v2268, 0.0
        %v2383 = vmax.f32 %v2271, 0.0
        %v2384 = vmax.f32 %v2276, 0.0
        %v2385 = vmax.f32 %v2279, 0.0
        %v2386 = vmax.f32 %v2284, 0.0
        %v2387 = vmax.f32 %v2287, 0.0
        %v2388 = vmax.f32 %v2292, 0.0
        %v2389 = vmax.f32 %v2295, 0.0
        %v2390 = vmax.f32 %v2300, 0.0
        %v2391 = vmax.f32 %v2303, 0.0
        %v2392 = vmax.f32 %v2308, 0.0
        %v2393 = vmax.f32 %v2311, 0.0
        %v2394 = vmax.f32 %v2316, 0.0
        %v2395 = vmax.f32 %v2319, 0.0
        %v2396 = vmax.f32 %v2324, 0.0
        %v2397 = vmax.f32 %v2327, 0.0
        %v2398 = vmax.f32 %v2332, 0.0
        %v2399 = vmax.f32 %v2335, 0.0
        %v2400 = vmax.f32 %v2340, 0.0
        %v2401 = vmax.f32 %v2343, 0.0
        %v2402 = vmax.f32 %v2348, 0.0
        %v2403 = vmax.f32 %v2351, 0.0
        %v2404 = vmax.f32 %v2356, 0.0
        %v2405 = vmax.f32 %v2359, 0.0
        %v2406 = vmax.f32 %v2364, 0.0
        %v2407 = vmax.f32 %v2367, 0.0
        %v2408 = vmax.f32 %v2372, 0.0
        %v2409 = vmax.f32 %v2375, 0.0
        %v2410 = vpack.c.bf16 %v2379, %v2378
        %v2411 = vpack.c.bf16 %v2381, %v2380
        %v2412 = vpack.c.bf16 %v2383, %v2382
        %v2413 = vpack.c.bf16 %v2385, %v2384
        %v2414 = vpack.c.bf16 %v2387, %v2386
        %v2415 = vpack.c.bf16 %v2389, %v2388
        %v2416 = vpack.c.bf16 %v2391, %v2390
        %v2417 = vpack.c.bf16 %v2393, %v2392
        %v2418 = vpack.c.bf16 %v2395, %v2394
        %v2419 = vpack.c.bf16 %v2397, %v2396
        %v2420 = vpack.c.bf16 %v2399, %v2398
        %v2421 = vpack.c.bf16 %v2401, %v2400
        %v2422 = vpack.c.bf16 %v2403, %v2402
        %v2423 = vpack.c.bf16 %v2405, %v2404
        %v2424 = vpack.c.bf16 %v2407, %v2406
        %v2425 = vpack.c.bf16 %v2409, %v2408
        %v2426 = vld [vmem:[%s5] sm:$0xf]
        %v2427 = vld [vmem:[%s5 + $0x4] sm:$0xf]
        %v2428 = vld [vmem:[%s5 + $0x8] sm:$0xf]
        %v2429 = vld [vmem:[%s5 + $0xc] sm:$0xf]
        %v2430 = vld [vmem:[%s6] sm:$0x1]
        %v2432 = vlaneseq
        %v2433 = vshrl.u32 %v2432, 7
        %v2434 = vsub.s32 0, %v2433
        %v2435 = vrot.slane %v2430, %v2434
        %v2441 = vunpack.c.l.b16 %v2426
        %v2442 = vunpack.c.l.b16 %v2427
        %v2443 = vunpack.c.l.b16 %v2428
        %v2444 = vunpack.c.l.b16 %v2429
        %v2445 = vpack.c.b16 %v2442, %v2441
        %v2446 = vpack.c.b16 %v2444, %v2443
        %v2450 = vsel %vm610, %v2410, 0
        %v2453 = vsel %vm610, %v2411, 0
        %v2456 = vsel %vm610, %v2412, 0
        %v2459 = vsel %vm610, %v2413, 0
        %v2462 = vsel %vm610, %v2414, 0
        %v2465 = vsel %vm610, %v2415, 0
        %v2468 = vsel %vm610, %v2416, 0
        %v2471 = vsel %vm610, %v2417, 0
        %v2474 = vsel %vm610, %v2418, 0
        %v2477 = vsel %vm610, %v2419, 0
        %v2480 = vsel %vm610, %v2420, 0
        %v2483 = vsel %vm610, %v2421, 0
        %v2486 = vsel %vm610, %v2422, 0
        %v2489 = vsel %vm610, %v2423, 0
        %v2492 = vsel %vm610, %v2424, 0
        %v2495 = vsel %vm610, %v2425, 0
        %2497 = vmatprep.subr.bf16.mxu0 0
        %2498 = vmatpush1.bf16.msra.mxu0 0
        %2499 = vmatprep.subr.bf16.mxu0 0
        %2500 = vmatpush1.bf16.msra.mxu0 0
        %2501 = vmatprep.subr.bf16.mxu0 0
        %2502 = vmatpush1.bf16.msra.mxu0 0
        %2503 = vmatprep.subr.bf16.mxu0 0
        %2504 = vmatpush1.bf16.msra.mxu0 0
        %2505 = vmatprep.subr.bf16.mxu0 0
        %2506 = vmatpush1.bf16.msra.mxu0 0
        %2507 = vmatprep.subr.bf16.mxu0 0
        %2508 = vmatpush1.bf16.msra.mxu0 0
        %2509 = vmatprep.subr.bf16.mxu0 0
        %2510 = vmatpush1.bf16.msra.mxu0 %v2446
        %2511 = vmatprep.subr.bf16.mxu0 0
        %2512 = vmatpush1.bf16.msra.mxu0 %v2445
        %2513 = vmatprep.subr.bf16.mxu0 0
        %2514 = vmatpush2.bf16.msra.mxu0 0
        %2515 = vmatprep.subr.bf16.mxu0 0
        %2516 = vmatpush2.bf16.msra.mxu0 0
        %2517 = vmatprep.subr.bf16.mxu0 0
        %2518 = vmatpush2.bf16.msra.mxu0 0
        %2519 = vmatprep.subr.bf16.mxu0 0
        %2520 = vmatpush2.bf16.msra.mxu0 0
        %2521 = vmatprep.subr.bf16.mxu0 0
        %2522 = vmatpush2.bf16.msra.mxu0 0
        %2523 = vmatprep.subr.bf16.mxu0 0
        %2524 = vmatpush2.bf16.msra.mxu0 0
        %2525 = vmatprep.subr.bf16.mxu0 0
        %2526 = vmatpush2.bf16.msra.mxu0 0
        %2527 = vmatprep.subr.bf16.mxu0 0
        %2528 = vmatpush2.bf16.msra.mxu0 0
        %2529 = vmatprep.mubr.bf16.mxu0 0
        %2530 = vmatmul.mubr.bf16.gmra.mxu0 %v2450
        %v2531 = vpop.f32.mrf.mxu0
        %v2532 = vadd.f32 %v2435, %v2531
        %v2533 = vpop.f32.mrf.mxu0
        %v2534 = vpop.f32.mrf.mxu0
        %v2535 = vadd.f32 %v2435, %v2534
        %v2536 = vpop.f32.mrf.mxu0
        %2537 = vmatprep.mubr.bf16.mxu0 0
        %2538 = vmatmul.mubr.bf16.gmra.mxu0 %v2453
        %v2539 = vpop.f32.mrf.mxu0
        %v2540 = vadd.f32 %v2435, %v2539
        %v2541 = vpop.f32.mrf.mxu0
        %v2542 = vpop.f32.mrf.mxu0
        %v2543 = vadd.f32 %v2435, %v2542
        %v2544 = vpop.f32.mrf.mxu0
        %2545 = vmatprep.mubr.bf16.mxu0 0
        %2546 = vmatmul.mubr.bf16.gmra.mxu0 %v2456
        %v2547 = vpop.f32.mrf.mxu0
        %v2548 = vadd.f32 %v2435, %v2547
        %v2549 = vpop.f32.mrf.mxu0
        %v2550 = vpop.f32.mrf.mxu0
        %v2551 = vadd.f32 %v2435, %v2550
        %v2552 = vpop.f32.mrf.mxu0
        %2553 = vmatprep.mubr.bf16.mxu0 0
        %2554 = vmatmul.mubr.bf16.gmra.mxu0 %v2459
        %v2555 = vpop.f32.mrf.mxu0
        %v2556 = vadd.f32 %v2435, %v2555
        %v2557 = vpop.f32.mrf.mxu0
        %v2558 = vpop.f32.mrf.mxu0
        %v2559 = vadd.f32 %v2435, %v2558
        %v2560 = vpop.f32.mrf.mxu0
        %2561 = vmatprep.mubr.bf16.mxu0 0
        %2562 = vmatmul.mubr.bf16.gmra.mxu0 %v2462
        %v2563 = vpop.f32.mrf.mxu0
        %v2564 = vadd.f32 %v2435, %v2563
        %v2565 = vpop.f32.mrf.mxu0
        %v2566 = vpop.f32.mrf.mxu0
        %v2567 = vadd.f32 %v2435, %v2566
        %v2568 = vpop.f32.mrf.mxu0
        %2569 = vmatprep.mubr.bf16.mxu0 0
        %2570 = vmatmul.mubr.bf16.gmra.mxu0 %v2465
        %v2571 = vpop.f32.mrf.mxu0
        %v2572 = vadd.f32 %v2435, %v2571
        %v2573 = vpop.f32.mrf.mxu0
        %v2574 = vpop.f32.mrf.mxu0
        %v2575 = vadd.f32 %v2435, %v2574
        %v2576 = vpop.f32.mrf.mxu0
        %2577 = vmatprep.mubr.bf16.mxu0 0
        %2578 = vmatmul.mubr.bf16.gmra.mxu0 %v2468
        %v2579 = vpop.f32.mrf.mxu0
        %v2580 = vadd.f32 %v2435, %v2579
        %v2581 = vpop.f32.mrf.mxu0
        %v2582 = vpop.f32.mrf.mxu0
        %v2583 = vadd.f32 %v2435, %v2582
        %v2584 = vpop.f32.mrf.mxu0
        %2585 = vmatprep.mubr.bf16.mxu0 0
        %2586 = vmatmul.mubr.bf16.gmra.mxu0 %v2471
        %v2587 = vpop.f32.mrf.mxu0
        %v2588 = vadd.f32 %v2435, %v2587
        %v2589 = vpop.f32.mrf.mxu0
        %v2590 = vpop.f32.mrf.mxu0
        %v2591 = vadd.f32 %v2435, %v2590
        %v2592 = vpop.f32.mrf.mxu0
        %2593 = vmatprep.mubr.bf16.mxu0 0
        %2594 = vmatmul.mubr.bf16.gmra.mxu0 %v2474
        %v2595 = vpop.f32.mrf.mxu0
        %v2596 = vadd.f32 %v2435, %v2595
        %v2597 = vpop.f32.mrf.mxu0
        %v2598 = vpop.f32.mrf.mxu0
        %v2599 = vadd.f32 %v2435, %v2598
        %v2600 = vpop.f32.mrf.mxu0
        %2601 = vmatprep.mubr.bf16.mxu0 0
        %2602 = vmatmul.mubr.bf16.gmra.mxu0 %v2477
        %v2603 = vpop.f32.mrf.mxu0
        %v2604 = vadd.f32 %v2435, %v2603
        %v2605 = vpop.f32.mrf.mxu0
        %v2606 = vpop.f32.mrf.mxu0
        %v2607 = vadd.f32 %v2435, %v2606
        %v2608 = vpop.f32.mrf.mxu0
        %2609 = vmatprep.mubr.bf16.mxu0 0
        %2610 = vmatmul.mubr.bf16.gmra.mxu0 %v2480
        %v2611 = vpop.f32.mrf.mxu0
        %v2612 = vadd.f32 %v2435, %v2611
        %v2613 = vpop.f32.mrf.mxu0
        %v2614 = vpop.f32.mrf.mxu0
        %v2615 = vadd.f32 %v2435, %v2614
        %v2616 = vpop.f32.mrf.mxu0
        %2617 = vmatprep.mubr.bf16.mxu0 0
        %2618 = vmatmul.mubr.bf16.gmra.mxu0 %v2483
        %v2619 = vpop.f32.mrf.mxu0
        %v2620 = vadd.f32 %v2435, %v2619
        %v2621 = vpop.f32.mrf.mxu0
        %v2622 = vpop.f32.mrf.mxu0
        %v2623 = vadd.f32 %v2435, %v2622
        %v2624 = vpop.f32.mrf.mxu0
        %2625 = vmatprep.mubr.bf16.mxu0 0
        %2626 = vmatmul.mubr.bf16.gmra.mxu0 %v2486
        %v2627 = vpop.f32.mrf.mxu0
        %v2628 = vadd.f32 %v2435, %v2627
        %v2629 = vpop.f32.mrf.mxu0
        %v2630 = vpop.f32.mrf.mxu0
        %v2631 = vadd.f32 %v2435, %v2630
        %v2632 = vpop.f32.mrf.mxu0
        %2633 = vmatprep.mubr.bf16.mxu0 0
        %2634 = vmatmul.mubr.bf16.gmra.mxu0 %v2489
        %v2635 = vpop.f32.mrf.mxu0
        %v2636 = vadd.f32 %v2435, %v2635
        %v2637 = vpop.f32.mrf.mxu0
        %v2638 = vpop.f32.mrf.mxu0
        %v2639 = vadd.f32 %v2435, %v2638
        %v2640 = vpop.f32.mrf.mxu0
        %2641 = vmatprep.mubr.bf16.mxu0 0
        %2642 = vmatmul.mubr.bf16.gmra.mxu0 %v2492
        %v2643 = vpop.f32.mrf.mxu0
        %v2644 = vadd.f32 %v2435, %v2643
        %v2645 = vpop.f32.mrf.mxu0
        %v2646 = vpop.f32.mrf.mxu0
        %v2647 = vadd.f32 %v2435, %v2646
        %v2648 = vpop.f32.mrf.mxu0
        %2649 = vmatprep.mubr.bf16.mxu0 0
        %2650 = vmatmul.mubr.bf16.gmra.mxu0 %v2495
        %v2651 = vpop.f32.mrf.mxu0
        %v2652 = vadd.f32 %v2435, %v2651
        %v2653 = vpop.f32.mrf.mxu0
        %v2654 = vpop.f32.mrf.mxu0
        %v2655 = vadd.f32 %v2435, %v2654
        %v2656 = vpop.f32.mrf.mxu0
        %2657 = vdwg.mxu0
        %v2658 = vadd.f32 %v2532, %v298
        %v2659 = vadd.f32 %v2535, %v299
        %v2660 = vadd.f32 %v2540, %v300
        %v2661 = vadd.f32 %v2543, %v301
        %v2662 = vadd.f32 %v2548, %v302
        %v2663 = vadd.f32 %v2551, %v303
        %v2664 = vadd.f32 %v2556, %v304
        %v2665 = vadd.f32 %v2559, %v305
        %v2666 = vadd.f32 %v2564, %v306
        %v2667 = vadd.f32 %v2567, %v307
        %v2668 = vadd.f32 %v2572, %v308
        %v2669 = vadd.f32 %v2575, %v309
        %v2670 = vadd.f32 %v2580, %v310
        %v2671 = vadd.f32 %v2583, %v311
        %v2672 = vadd.f32 %v2588, %v312
        %v2673 = vadd.f32 %v2591, %v313
        %v2674 = vadd.f32 %v2596, %v314
        %v2675 = vadd.f32 %v2599, %v315
        %v2676 = vadd.f32 %v2604, %v316
        %v2677 = vadd.f32 %v2607, %v317
        %v2678 = vadd.f32 %v2612, %v318
        %v2679 = vadd.f32 %v2615, %v319
        %v2680 = vadd.f32 %v2620, %v320
        %v2681 = vadd.f32 %v2623, %v321
        %v2682 = vadd.f32 %v2628, %v322
        %v2683 = vadd.f32 %v2631, %v323
        %v2684 = vadd.f32 %v2636, %v324
        %v2685 = vadd.f32 %v2639, %v325
        %v2686 = vadd.f32 %v2644, %v326
        %v2687 = vadd.f32 %v2647, %v327
        %v2688 = vadd.f32 %v2652, %v328
        %v2689 = vadd.f32 %v2655, %v329
        %v2690 = vmax.f32 %v2658, 0.0
        %v2691 = vmax.f32 %v2659, 0.0
        %v2692 = vmax.f32 %v2660, 0.0
        %v2693 = vmax.f32 %v2661, 0.0
        %v2694 = vmax.f32 %v2662, 0.0
        %v2695 = vmax.f32 %v2663, 0.0
        %v2696 = vmax.f32 %v2664, 0.0
        %v2697 = vmax.f32 %v2665, 0.0
        %v2698 = vmax.f32 %v2666, 0.0
        %v2699 = vmax.f32 %v2667, 0.0
        %v2700 = vmax.f32 %v2668, 0.0
        %v2701 = vmax.f32 %v2669, 0.0
        %v2702 = vmax.f32 %v2670, 0.0
        %v2703 = vmax.f32 %v2671, 0.0
        %v2704 = vmax.f32 %v2672, 0.0
        %v2705 = vmax.f32 %v2673, 0.0
        %v2706 = vmax.f32 %v2674, 0.0
        %v2707 = vmax.f32 %v2675, 0.0
        %v2708 = vmax.f32 %v2676, 0.0
        %v2709 = vmax.f32 %v2677, 0.0
        %v2710 = vmax.f32 %v2678, 0.0
        %v2711 = vmax.f32 %v2679, 0.0
        %v2712 = vmax.f32 %v2680, 0.0
        %v2713 = vmax.f32 %v2681, 0.0
        %v2714 = vmax.f32 %v2682, 0.0
        %v2715 = vmax.f32 %v2683, 0.0
        %v2716 = vmax.f32 %v2684, 0.0
        %v2717 = vmax.f32 %v2685, 0.0
        %v2718 = vmax.f32 %v2686, 0.0
        %v2719 = vmax.f32 %v2687, 0.0
        %v2720 = vmax.f32 %v2688, 0.0
        %v2721 = vmax.f32 %v2689, 0.0
        %2722 = vst [vmem:[%s296] sm:$0xff] %v2690
        %2723 = vst [vmem:[%s296 + $0x8] sm:$0xff] %v2691
        %2724 = vst [vmem:[%s296 + $0x10] sm:$0xff] %v2692
        %2725 = vst [vmem:[%s296 + $0x18] sm:$0xff] %v2693
        %2726 = vst [vmem:[%s296 + $0x20] sm:$0xff] %v2694
        %2727 = vst [vmem:[%s296 + $0x28] sm:$0xff] %v2695
        %2728 = vst [vmem:[%s296 + $0x30] sm:$0xff] %v2696
        %2729 = vst [vmem:[%s296 + $0x38] sm:$0xff] %v2697
        %2730 = vst [vmem:[%s296 + $0x40] sm:$0xff] %v2698
        %2731 = vst [vmem:[%s296 + $0x48] sm:$0xff] %v2699
        %2732 = vst [vmem:[%s296 + $0x50] sm:$0xff] %v2700
        %2733 = vst [vmem:[%s296 + $0x58] sm:$0xff] %v2701
        %2734 = vst [vmem:[%s296 + $0x60] sm:$0xff] %v2702
        %2735 = vst [vmem:[%s296 + $0x68] sm:$0xff] %v2703
        %2736 = vst [vmem:[%s296 + $0x70] sm:$0xff] %v2704
        %2737 = vst [vmem:[%s296 + $0x78] sm:$0xff] %v2705
        %2738 = vst [vmem:[%s296 + $0x80] sm:$0xff] %v2706
        %2739 = vst [vmem:[%s296 + $0x88] sm:$0xff] %v2707
        %2740 = vst [vmem:[%s296 + $0x90] sm:$0xff] %v2708
        %2741 = vst [vmem:[%s296 + $0x98] sm:$0xff] %v2709
        %2742 = vst [vmem:[%s296 + $0xa0] sm:$0xff] %v2710
        %2743 = vst [vmem:[%s296 + $0xa8] sm:$0xff] %v2711
        %2744 = vst [vmem:[%s296 + $0xb0] sm:$0xff] %v2712
        %2745 = vst [vmem:[%s296 + $0xb8] sm:$0xff] %v2713
        %2746 = vst [vmem:[%s296 + $0xc0] sm:$0xff] %v2714
        %2747 = vst [vmem:[%s296 + $0xc8] sm:$0xff] %v2715
        %2748 = vst [vmem:[%s296 + $0xd0] sm:$0xff] %v2716
        %2749 = vst [vmem:[%s296 + $0xd8] sm:$0xff] %v2717
        %2750 = vst [vmem:[%s296 + $0xe0] sm:$0xff] %v2718
        %2751 = vst [vmem:[%s296 + $0xe8] sm:$0xff] %v2719
        %2752 = vst [vmem:[%s296 + $0xf0] sm:$0xff] %v2720
        %2753 = vst [vmem:[%s296 + $0xf8] sm:$0xff] %v2721
        %s2754 = sand.u32 %s184, 1
        %s2755 = scalar_lea.sflag [#allocation5], %s2754
        %s2756 = sand.u32 %s184, 1
        %s2757 = smul.addr %s2756, 256
        %s2758 = scalar_lea.vmem [#allocation6], %s2757
        // Predicated region
        $region53: #{tpu_custom_call.1} parent=47 // pred_check
          %p2759 = pneg %p194
        $region54: #{tpu_custom_call.1} parent=47 // pred_check_branch
          %2761 = sbr.rel (%p2759) target = $region56
        $region55: #{tpu_custom_call.1} parent=47 // pred_region
          %s2763 = ssub.s32 4096, 4096
          %2764 = vsyncadd %s2755, %s2763
          %s2765 = smul.addr %s24, 32
          %s2766 = smul.addr %s2765, 128
          %s2767 = scalar_lea.hbm %s7, %s2766
          %s2768 = sshll.u32 %s2758, 4
          %s2769 = int_to_ptr.vmem [resolvable:$true] %s2768
          %2774 = dma.vmem_to_hbm [thread:$0]  %s2769, 4096, %s2767, %s2755, 128, 128, 8
        $region56: #{tpu_custom_call.1} parent=47 // pred_fallthru
          _
      $region48: #{tpu_custom_call.1} parent=5 // pred_fallthru
        _
      %p2775 = scmp.le.s32.totalorder 2, %s19
      // Predicated region
      $region57: #{tpu_custom_call.1} parent=5 // pred_check
        %p2776 = pneg %p2775
      $region58: #{tpu_custom_call.1} parent=5 // pred_check_branch
        %2778 = sbr.rel (%p2776) target = $region60
      $region59: #{tpu_custom_call.1} parent=5 // pred_region
        %s2779 = ssub.s32 %s19, 2
        // Predicated region
        $region61: #{tpu_custom_call.1} parent=59 // pred_check
          %p2780 = pneg %p200
        $region62: #{tpu_custom_call.1} parent=59 // pred_check_branch
          %2782 = sbr.rel (%p2780) target = $region64
        $region63: #{tpu_custom_call.1} parent=59 // pred_region
          %s2783 = sand.u32 %s185, 1
          %s2784 = scalar_lea.sflag [#allocation5], %s2783
          %s2785 = sand.u32 %s185, 1
          %s2786 = smul.addr %s2785, 256
          %s2787 = scalar_lea.vmem [#allocation6], %s2786
          %2788 = dma.done %s2784, 4096
        $region64: #{tpu_custom_call.1} parent=59 // pred_fallthru
          _
      $region60: #{tpu_custom_call.1} parent=5 // pred_fallthru
        _
    $region6: #{tpu_custom_call.1} parent=1 // loop_footer
      %s23 = sadd.s32 1, %s19
    $region7: #{tpu_custom_call.1} parent=1 // loop_footer_branch
      %18 = sbr.rel target = $region3
    $region8: #{tpu_custom_call.1} parent=1 // loop_exit
      _
    %2789 = vsyncpa [#allocation4], 1
    %s2790 = scalar_lea.sflag [#allocation4], 1
    %2791 = vsyncpa %s2790, 1
    %2792 = vsyncpa [#allocation5], 1
    %s2793 = scalar_lea.sflag [#allocation5], 1
    %2794 = vsyncpa %s2793, 1

</llo_original>
